<compile_context>
chip_gen: v5e
topology: v5e:2x2
jax: 0.10.0
libtpu: 0.0.40
codegen_flags: <defaults>
</compile_context>

<pallas_src>
import jax
import jax.numpy as jnp
from jax import lax
from jax.experimental import pallas as pl
from jax.experimental.pallas import tpu as pltpu


# ----------------------------------------------------------------------------
# Fused CenterNetHead kernel
# ----------------------------------------------------------------------------
def _head_kernel(x_ref, wdw_ref, wpc_ref, bpc_ref, wpw_ref, bpw_ref,
                 cls_ref, wh_ref):
    """One (batch, row-tile) grid step of the fused CenterNet head.

    x_ref   : (1, H, W, C)  full NHWC plane of this batch element (resident:
                            its block index is constant along the row axis).
    wdw_ref : (2, 3, 3, C)  depthwise 3x3 weights, [0]=cls head, [1]=wh head.
    wpc_ref : (C, nc)  bpc_ref : (1, nc)   cls pointwise weight / bias
    wpw_ref : (C, 4)   bpw_ref : (1, 4)    wh  pointwise weight / bias
    cls_ref : (1, TH*W, nc)   outputs for rows [h*TH, (h+1)*TH)
    wh_ref  : (1, TH*W, 4)
    """
    H, W = x_ref.shape[1], x_ref.shape[2]
    C = x_ref.shape[3]
    M = cls_ref.shape[1]
    TH = M // W

    h = pl.program_id(1)
    n_h = pl.num_programs(1)
    row0 = pl.multiple_of(h * TH, TH)

    f32 = jnp.float32
    x_mid = x_ref[0, pl.ds(row0, TH)].astype(f32)                 # (TH, W, C)

    # 1-row halos: loads are clamped (always in-bounds), values zeroed at the
    # true image border -> exactly the zero padding of the 3x3 conv.
    top_valid = (h > 0).astype(f32)
    bot_valid = (h < n_h - 1).astype(f32)
    row_top = x_ref[0, pl.ds(jnp.maximum(row0 - 1, 0), 1)].astype(f32) * top_valid
    row_bot = x_ref[0, pl.ds(jnp.minimum(row0 + TH, H - 1), 1)].astype(f32) * bot_valid

    # Rows aligned with output rows.  H is the major (untiled) axis, so these
    # slices / concats are plain address moves (no relayout).
    above = jnp.concatenate([row_top, x_mid[:TH - 1]], axis=0)    # x[r-1]
    below = jnp.concatenate([x_mid[1:], row_bot], axis=0)         # x[r+1]

    # Column (sublane-axis) shifts via XLU rolls + border masks, shared by
    # both heads.
    col = lax.broadcasted_iota(jnp.int32, (1, W, 1), 1)
    not_first = (col >= 1).astype(f32)
    not_last = (col <= W - 2).astype(f32)

    def shift_lr(v):
        left = pltpu.roll(v, 1, 1) * not_first        # value at col j is v[:, j-1]
        right = pltpu.roll(v, W - 1, 1) * not_last    # value at col j is v[:, j+1]
        return left, right

    a_l, a_r = shift_lr(above)
    m_l, m_r = shift_lr(x_mid)
    b_l, b_r = shift_lr(below)

    taps = ((a_l, 0, 0), (above, 0, 1), (a_r, 0, 2),
            (m_l, 1, 0), (x_mid, 1, 1), (m_r, 1, 2),
            (b_l, 2, 0), (below, 2, 1), (b_r, 2, 2))

    def depthwise(head):
        w = wdw_ref[head].astype(f32)                 # (3, 3, C)
        acc = None
        for v, dy, dx in taps:
            t = v * w[dy, dx][None, None, :]
            acc = t if acc is None else acc + t
        return acc.reshape(M, C)

    # cls head: dw -> 1x1 matmul (+bias) -> sigmoid (fused epilogue).
    y_cls = jnp.dot(depthwise(0), wpc_ref[...].astype(f32),
                    preferred_element_type=f32) + bpc_ref[...].astype(f32)
    cls_ref[0] = jax.nn.sigmoid(y_cls).astype(cls_ref.dtype)

    # wh head: dw -> 1x1 matmul (+bias).
    y_wh = jnp.dot(depthwise(1), wpw_ref[...].astype(f32),
                   preferred_element_type=f32) + bpw_ref[...].astype(f32)
    wh_ref[0] = y_wh.astype(wh_ref.dtype)


def _pick_tile_h(H):
    # 8-row strips: multiple of the sublane tile; at real CenterNet sizes
    # (W=128) this gives M = 1024 per step, inside the 512-2048 sweet spot.
    return 8 if H % 8 == 0 else H


def centernet_head_forward(params, x_nchw):
    """CenterNetHead.forward: (sigmoid(cls), wh); NCHW in, NCHW out."""
    B, C, H, W = x_nchw.shape
    nc = params["cls_pw_w"].shape[1]
    TH = _pick_tile_h(H)
    n_h = H // TH
    M = TH * W

    x = jnp.transpose(x_nchw, (0, 2, 3, 1))          # NCHW -> NHWC (C on lanes)

    plane_bytes = H * W * C * x.dtype.itemsize
    vmem_limit = int(min(64 * 2 ** 20, max(32 * 2 ** 20,
                                           4 * plane_bytes + 8 * 2 ** 20)))

    cls_flat, wh_flat = pl.pallas_call(
        _head_kernel,
        out_shape=(jax.ShapeDtypeStruct((B, H * W, nc), x.dtype),
                   jax.ShapeDtypeStruct((B, H * W, 4), x.dtype)),
        grid=(B, n_h),
        in_specs=[
            # Full plane per batch; block index constant along the row-tile
            # axis, so the HBM->VMEM copy happens once per batch element.
            pl.BlockSpec((1, H, W, C), lambda b, h: (b, 0, 0, 0)),
            pl.BlockSpec((2, 3, 3, C), lambda b, h: (0, 0, 0, 0)),
            pl.BlockSpec((C, nc), lambda b, h: (0, 0)),
            pl.BlockSpec((1, nc), lambda b, h: (0, 0)),
            pl.BlockSpec((C, 4), lambda b, h: (0, 0)),
            pl.BlockSpec((1, 4), lambda b, h: (0, 0)),
        ],
        out_specs=(
            pl.BlockSpec((1, M, nc), lambda b, h: (b, h, 0)),
            pl.BlockSpec((1, M, 4), lambda b, h: (b, h, 0)),
        ),
        compiler_params=pltpu.CompilerParams(
            # batch axis shards across the 2 TCs on v7x; row-tile axis stays
            # sequential so the resident input plane is fetched only once.
            dimension_semantics=("parallel", "arbitrary"),
            vmem_limit_bytes=vmem_limit,
        ),
    )(x, params["dw_w"], params["cls_pw_w"], params["cls_pw_b"],
      params["wh_pw_w"], params["wh_pw_b"])

    # Tiny (Cout = nc/4 channels) transposes back to NCHW; negligible traffic.
    cls = jnp.transpose(cls_flat, (0, 2, 1)).reshape(B, nc, H, W)
    wh = jnp.transpose(wh_flat, (0, 2, 1)).reshape(B, 4, H, W)
    return cls, wh


# ----------------------------------------------------------------------------
# Parameters (faithful to the PyTorch init where specified)
# ----------------------------------------------------------------------------
def init_head_params(key, nc, head_dim=128):
    k1, k2, k3, k4 = jax.random.split(key, 4)
    # TODO(synk): SeparableConv2d internals (depthwise init / depthwise bias)
    # are not shown in the reference snippet; depthwise is bias-free, N(0,0.1).
    dw = jnp.stack([
        0.1 * jax.random.normal(k1, (3, 3, head_dim), jnp.float32),   # cls
        0.1 * jax.random.normal(k2, (3, 3, head_dim), jnp.float32),   # wh
    ])
    return {
        "dw_w": dw,                                                    # (2,3,3,C)
        # normal_init(self.cls.pointwise, 0, 0.01, -2.19)
        "cls_pw_w": 0.01 * jax.random.normal(k3, (head_dim, nc), jnp.float32),
        "cls_pw_b": jnp.full((1, nc), -2.19, jnp.float32),
        # normal_init(self.wh.pointwise, 0, 0.01, 0)
        "wh_pw_w": 0.01 * jax.random.normal(k4, (head_dim, 4), jnp.float32),
        "wh_pw_b": jnp.zeros((1, 4), jnp.float32),
    }


# ----------------------------------------------------------------------------
# Pure-JAX reference (for correctness checking)
# ----------------------------------------------------------------------------
def reference_forward(params, x_nchw):
    x = jnp.transpose(x_nchw, (0, 2, 3, 1)).astype(jnp.float32)
    B, H, W, C = x.shape
    xp = jnp.pad(x, ((0, 0), (1, 1), (1, 1), (0, 0)))

    def depthwise(head):
        w = params["dw_w"][head]
        acc = jnp.zeros_like(x)
        for dy in range(3):
            for dx in range(3):
                acc = acc + xp[:, dy:dy + H, dx:dx + W, :] * w[dy, dx]
        return acc

    hp = lax.Precision.HIGHEST
    cls = jnp.einsum("bhwc,cn->bhwn", depthwise(0), params["cls_pw_w"],
                     precision=hp) + params["cls_pw_b"][0]
    wh = jnp.einsum("bhwc,cn->bhwn", depthwise(1), params["wh_pw_w"],
                    precision=hp) + params["wh_pw_b"][0]
    cls = jax.nn.sigmoid(cls)
    return jnp.transpose(cls, (0, 3, 1, 2)), jnp.transpose(wh, (0, 3, 1, 2))


# ----------------------------------------------------------------------------
if __name__ == "__main__":
    key = jax.random.PRNGKey(0)
    kp, kx = jax.random.split(key)

    nc, head_dim = 4, 128          # CenterNetHead(nc, head_dims=[128, 128, 128])
    B, H, W = 2, 16, 16
    params = init_head_params(kp, nc, head_dim)
    x = jax.random.normal(kx, (B, head_dim, H, W), dtype=jnp.float32)  # NCHW

    fwd = jax.jit(centernet_head_forward)
    cls, wh = fwd(params, x)
    jax.block_until_ready((cls, wh))

    assert cls.shape == (B, nc, H, W), cls.shape
    assert wh.shape == (B, 4, H, W), wh.shape
    assert bool(jnp.all((cls >= 0.0) & (cls <= 1.0)))

    cls_ref, wh_ref = reference_forward(params, x)
    assert bool(jnp.allclose(cls, cls_ref, atol=3e-3, rtol=3e-3)), (
        "cls max abs diff", float(jnp.max(jnp.abs(cls - cls_ref))))
    assert bool(jnp.allclose(wh, wh_ref, atol=3e-3, rtol=3e-3)), (
        "wh max abs diff", float(jnp.max(jnp.abs(wh - wh_ref))))

    print("KERNEL_OK")
</pallas_src>

<mosaic_0001>
module attributes {stable_mosaic.version = 11 : i64} {
  func.func @_head_kernel(%arg0: i32, %arg1: i32, %arg2: memref<1x16x16x128xf32, #tpu.memory_space<vmem>>, %arg3: memref<2x3x3x128xf32, #tpu.memory_space<vmem>>, %arg4: memref<128x4xf32, #tpu.memory_space<vmem>>, %arg5: memref<1x4xf32, #tpu.memory_space<vmem>>, %arg6: memref<128x4xf32, #tpu.memory_space<vmem>>, %arg7: memref<1x4xf32, #tpu.memory_space<vmem>>, %arg8: memref<1x128x4xf32, #tpu.memory_space<vmem>>, %arg9: memref<1x128x4xf32, #tpu.memory_space<vmem>>) attributes {dimension_semantics = [#tpu.dimension_semantics<parallel>, #tpu.dimension_semantics<arbitrary>], iteration_bounds = array<i64: 2, 2>, scalar_prefetch = 0 : i64, scratch_operands = 0 : i64, tpu.core_type = #tpu.core_type<tc>, window_params = [{transform_indices = @transform_0, window_bounds = array<i64: 1, 16, 16, 128>}, {pipeline_mode = #tpu.pipeline_mode<synchronous>, transform_indices = @transform_1, window_bounds = array<i64: 2, 3, 3, 128>}, {pipeline_mode = #tpu.pipeline_mode<synchronous>, transform_indices = @transform_2, window_bounds = array<i64: 128, 4>}, {pipeline_mode = #tpu.pipeline_mode<synchronous>, transform_indices = @transform_3, window_bounds = array<i64: 1, 4>}, {pipeline_mode = #tpu.pipeline_mode<synchronous>, transform_indices = @transform_4, window_bounds = array<i64: 128, 4>}, {pipeline_mode = #tpu.pipeline_mode<synchronous>, transform_indices = @transform_5, window_bounds = array<i64: 1, 4>}, {transform_indices = @transform_6, window_bounds = array<i64: 1, 128, 4>}, {transform_indices = @transform_7, window_bounds = array<i64: 1, 128, 4>}]} {
    %c8_i32 = arith.constant 8 : i32
    %0 = arith.muli %arg1, %c8_i32 : i32
    %1 = tpu.assume_multiple %0, 8 : i32
    %c0 = arith.constant 0 : index
    %2 = arith.index_cast %1 : i32 to index
    %c0_0 = arith.constant 0 : index
    %c0_1 = arith.constant 0 : index
    %3 = vector.load %arg2[%c0, %2, %c0_0, %c0_1] : memref<1x16x16x128xf32, #tpu.memory_space<vmem>>, vector<1x8x16x128xf32>
    %4 = vector.shape_cast %3 : vector<1x8x16x128xf32> to vector<8x16x128xf32>
    %c0_i32 = arith.constant 0 : i32
    %5 = arith.cmpi sgt, %arg1, %c0_i32 : i32
    %6 = arith.extui %5 : i1 to i32
    %7 = arith.sitofp %6 : i32 to f32
    %c1_i32 = arith.constant 1 : i32
    %8 = arith.cmpi slt, %arg1, %c1_i32 : i32
    %9 = arith.extui %8 : i1 to i32
    %10 = arith.sitofp %9 : i32 to f32
    %c1_i32_2 = arith.constant 1 : i32
    %11 = arith.subi %1, %c1_i32_2 : i32
    %c0_i32_3 = arith.constant 0 : i32
    %12 = arith.maxsi %11, %c0_i32_3 : i32
    %c0_4 = arith.constant 0 : index
    %13 = arith.index_cast %12 : i32 to index
    %c0_5 = arith.constant 0 : index
    %c0_6 = arith.constant 0 : index
    %14 = vector.load %arg2[%c0_4, %13, %c0_5, %c0_6] : memref<1x16x16x128xf32, #tpu.memory_space<vmem>>, vector<1x1x16x128xf32>
    %15 = vector.shape_cast %14 : vector<1x1x16x128xf32> to vector<1x16x128xf32>
    %16 = vector.broadcast %7 : f32 to vector<1x16x128xf32>
    %17 = arith.mulf %15, %16 : vector<1x16x128xf32>
    %c8_i32_7 = arith.constant 8 : i32
    %18 = arith.addi %1, %c8_i32_7 : i32
    %c15_i32 = arith.constant 15 : i32
    %19 = arith.minsi %18, %c15_i32 : i32
    %c0_8 = arith.constant 0 : index
    %20 = arith.index_cast %19 : i32 to index
    %c0_9 = arith.constant 0 : index
    %c0_10 = arith.constant 0 : index
    %21 = vector.load %arg2[%c0_8, %20, %c0_9, %c0_10] : memref<1x16x16x128xf32, #tpu.memory_space<vmem>>, vector<1x1x16x128xf32>
    %22 = vector.shape_cast %21 : vector<1x1x16x128xf32> to vector<1x16x128xf32>
    %23 = vector.broadcast %10 : f32 to vector<1x16x128xf32>
    %24 = arith.mulf %22, %23 : vector<1x16x128xf32>
    %25 = vector.extract_strided_slice %4 {offsets = [0, 0, 0], sizes = [7, 16, 128], strides = [1, 1, 1]} : vector<8x16x128xf32> to vector<7x16x128xf32>
    %26 = tpu.concatenate %17, %25 in 0 : vector<1x16x128xf32>, vector<7x16x128xf32> -> vector<8x16x128xf32>
    %27 = vector.extract_strided_slice %4 {offsets = [1, 0, 0], sizes = [7, 16, 128], strides = [1, 1, 1]} : vector<8x16x128xf32> to vector<7x16x128xf32>
    %28 = tpu.concatenate %27, %24 in 0 : vector<7x16x128xf32>, vector<1x16x128xf32> -> vector<8x16x128xf32>
    %29 = tpu.iota {dimensions = array<i32: 1>} : vector<1x16x1xi32>
    %c1_i32_11 = arith.constant 1 : i32
    %30 = vector.broadcast %c1_i32_11 : i32 to vector<1x16x1xi32>
    %31 = arith.cmpi sge, %29, %30 : vector<1x16x1xi32>
    %32 = arith.extui %31 : vector<1x16x1xi1> to vector<1x16x1xi32>
    %33 = arith.sitofp %32 : vector<1x16x1xi32> to vector<1x16x1xf32>
    %c14_i32 = arith.constant 14 : i32
    %34 = vector.broadcast %c14_i32 : i32 to vector<1x16x1xi32>
    %35 = arith.cmpi sle, %29, %34 : vector<1x16x1xi32>
    %36 = arith.extui %35 : vector<1x16x1xi1> to vector<1x16x1xi32>
    %37 = arith.sitofp %36 : vector<1x16x1xi32> to vector<1x16x1xf32>
    %c1_i32_12 = arith.constant 1 : i32
    %38 = tpu.dynamic_rotate %26 by %c1_i32_12 dim 1 : vector<8x16x128xf32>, i32 -> vector<8x16x128xf32>
    %39 = vector.broadcast %33 : vector<1x16x1xf32> to vector<8x16x128xf32>
    %40 = arith.mulf %38, %39 : vector<8x16x128xf32>
    %c15_i32_13 = arith.constant 15 : i32
    %41 = tpu.dynamic_rotate %26 by %c15_i32_13 dim 1 : vector<8x16x128xf32>, i32 -> vector<8x16x128xf32>
    %42 = vector.broadcast %37 : vector<1x16x1xf32> to vector<8x16x128xf32>
    %43 = arith.mulf %41, %42 : vector<8x16x128xf32>
    %c1_i32_14 = arith.constant 1 : i32
    %44 = tpu.dynamic_rotate %4 by %c1_i32_14 dim 1 : vector<8x16x128xf32>, i32 -> vector<8x16x128xf32>
    %45 = vector.broadcast %33 : vector<1x16x1xf32> to vector<8x16x128xf32>
    %46 = arith.mulf %44, %45 : vector<8x16x128xf32>
    %c15_i32_15 = arith.constant 15 : i32
    %47 = tpu.dynamic_rotate %4 by %c15_i32_15 dim 1 : vector<8x16x128xf32>, i32 -> vector<8x16x128xf32>
    %48 = vector.broadcast %37 : vector<1x16x1xf32> to vector<8x16x128xf32>
    %49 = arith.mulf %47, %48 : vector<8x16x128xf32>
    %c1_i32_16 = arith.constant 1 : i32
    %50 = tpu.dynamic_rotate %28 by %c1_i32_16 dim 1 : vector<8x16x128xf32>, i32 -> vector<8x16x128xf32>
    %51 = vector.broadcast %33 : vector<1x16x1xf32> to vector<8x16x128xf32>
    %52 = arith.mulf %50, %51 : vector<8x16x128xf32>
    %c15_i32_17 = arith.constant 15 : i32
    %53 = tpu.dynamic_rotate %28 by %c15_i32_17 dim 1 : vector<8x16x128xf32>, i32 -> vector<8x16x128xf32>
    %54 = vector.broadcast %37 : vector<1x16x1xf32> to vector<8x16x128xf32>
    %55 = arith.mulf %53, %54 : vector<8x16x128xf32>
    %c0_18 = arith.constant 0 : index
    %c0_19 = arith.constant 0 : index
    %c0_20 = arith.constant 0 : index
    %c0_21 = arith.constant 0 : index
    %56 = vector.load %arg3[%c0_18, %c0_19, %c0_20, %c0_21] : memref<2x3x3x128xf32, #tpu.memory_space<vmem>>, vector<1x3x3x128xf32>
    %57 = vector.shape_cast %56 : vector<1x3x3x128xf32> to vector<3x3x128xf32>
    %58 = vector.extract_strided_slice %57 {offsets = [0, 0, 0], sizes = [1, 1, 128], strides = [1, 1, 1]} : vector<3x3x128xf32> to vector<1x1x128xf32>
    %59 = vector.shape_cast %58 : vector<1x1x128xf32> to vector<128xf32>
    %60 = vector.shape_cast %59 : vector<128xf32> to vector<1x1x128xf32>
    %61 = vector.broadcast %60 : vector<1x1x128xf32> to vector<8x16x128xf32>
    %62 = arith.mulf %40, %61 : vector<8x16x128xf32>
    %63 = vector.extract_strided_slice %57 {offsets = [0, 1, 0], sizes = [1, 1, 128], strides = [1, 1, 1]} : vector<3x3x128xf32> to vector<1x1x128xf32>
    %64 = vector.shape_cast %63 : vector<1x1x128xf32> to vector<128xf32>
    %65 = vector.shape_cast %64 : vector<128xf32> to vector<1x1x128xf32>
    %66 = vector.broadcast %65 : vector<1x1x128xf32> to vector<8x16x128xf32>
    %67 = arith.mulf %26, %66 : vector<8x16x128xf32>
    %68 = arith.addf %62, %67 : vector<8x16x128xf32>
    %69 = vector.extract_strided_slice %57 {offsets = [0, 2, 0], sizes = [1, 1, 128], strides = [1, 1, 1]} : vector<3x3x128xf32> to vector<1x1x128xf32>
    %70 = vector.shape_cast %69 : vector<1x1x128xf32> to vector<128xf32>
    %71 = vector.shape_cast %70 : vector<128xf32> to vector<1x1x128xf32>
    %72 = vector.broadcast %71 : vector<1x1x128xf32> to vector<8x16x128xf32>
    %73 = arith.mulf %43, %72 : vector<8x16x128xf32>
    %74 = arith.addf %68, %73 : vector<8x16x128xf32>
    %75 = vector.extract_strided_slice %57 {offsets = [1, 0, 0], sizes = [1, 1, 128], strides = [1, 1, 1]} : vector<3x3x128xf32> to vector<1x1x128xf32>
    %76 = vector.shape_cast %75 : vector<1x1x128xf32> to vector<128xf32>
    %77 = vector.shape_cast %76 : vector<128xf32> to vector<1x1x128xf32>
    %78 = vector.broadcast %77 : vector<1x1x128xf32> to vector<8x16x128xf32>
    %79 = arith.mulf %46, %78 : vector<8x16x128xf32>
    %80 = arith.addf %74, %79 : vector<8x16x128xf32>
    %81 = vector.extract_strided_slice %57 {offsets = [1, 1, 0], sizes = [1, 1, 128], strides = [1, 1, 1]} : vector<3x3x128xf32> to vector<1x1x128xf32>
    %82 = vector.shape_cast %81 : vector<1x1x128xf32> to vector<128xf32>
    %83 = vector.shape_cast %82 : vector<128xf32> to vector<1x1x128xf32>
    %84 = vector.broadcast %83 : vector<1x1x128xf32> to vector<8x16x128xf32>
    %85 = arith.mulf %4, %84 : vector<8x16x128xf32>
    %86 = arith.addf %80, %85 : vector<8x16x128xf32>
    %87 = vector.extract_strided_slice %57 {offsets = [1, 2, 0], sizes = [1, 1, 128], strides = [1, 1, 1]} : vector<3x3x128xf32> to vector<1x1x128xf32>
    %88 = vector.shape_cast %87 : vector<1x1x128xf32> to vector<128xf32>
    %89 = vector.shape_cast %88 : vector<128xf32> to vector<1x1x128xf32>
    %90 = vector.broadcast %89 : vector<1x1x128xf32> to vector<8x16x128xf32>
    %91 = arith.mulf %49, %90 : vector<8x16x128xf32>
    %92 = arith.addf %86, %91 : vector<8x16x128xf32>
    %93 = vector.extract_strided_slice %57 {offsets = [2, 0, 0], sizes = [1, 1, 128], strides = [1, 1, 1]} : vector<3x3x128xf32> to vector<1x1x128xf32>
    %94 = vector.shape_cast %93 : vector<1x1x128xf32> to vector<128xf32>
    %95 = vector.shape_cast %94 : vector<128xf32> to vector<1x1x128xf32>
    %96 = vector.broadcast %95 : vector<1x1x128xf32> to vector<8x16x128xf32>
    %97 = arith.mulf %52, %96 : vector<8x16x128xf32>
    %98 = arith.addf %92, %97 : vector<8x16x128xf32>
    %99 = vector.extract_strided_slice %57 {offsets = [2, 1, 0], sizes = [1, 1, 128], strides = [1, 1, 1]} : vector<3x3x128xf32> to vector<1x1x128xf32>
    %100 = vector.shape_cast %99 : vector<1x1x128xf32> to vector<128xf32>
    %101 = vector.shape_cast %100 : vector<128xf32> to vector<1x1x128xf32>
    %102 = vector.broadcast %101 : vector<1x1x128xf32> to vector<8x16x128xf32>
    %103 = arith.mulf %28, %102 : vector<8x16x128xf32>
    %104 = arith.addf %98, %103 : vector<8x16x128xf32>
    %105 = vector.extract_strided_slice %57 {offsets = [2, 2, 0], sizes = [1, 1, 128], strides = [1, 1, 1]} : vector<3x3x128xf32> to vector<1x1x128xf32>
    %106 = vector.shape_cast %105 : vector<1x1x128xf32> to vector<128xf32>
    %107 = vector.shape_cast %106 : vector<128xf32> to vector<1x1x128xf32>
    %108 = vector.broadcast %107 : vector<1x1x128xf32> to vector<8x16x128xf32>
    %109 = arith.mulf %55, %108 : vector<8x16x128xf32>
    %110 = arith.addf %104, %109 : vector<8x16x128xf32>
    %111 = vector.shape_cast %110 : vector<8x16x128xf32> to vector<128x128xf32>
    %c0_22 = arith.constant 0 : index
    %c0_23 = arith.constant 0 : index
    %112 = vector.load %arg4[%c0_22, %c0_23] : memref<128x4xf32, #tpu.memory_space<vmem>>, vector<128x4xf32>
    %cst = arith.constant dense<0.000000e+00> : vector<128x4xf32>
    %113 = tpu.matmul %111, %112, %cst {dimension_numbers = #tpu.dot_dimension_numbers<[1], [0], [0], [1], [0, 0, 1, 1], [], []>} : vector<128x128xf32>, vector<128x4xf32>, vector<128x4xf32> -> vector<128x4xf32>
    %c0_24 = arith.constant 0 : index
    %c0_25 = arith.constant 0 : index
    %114 = vector.load %arg5[%c0_24, %c0_25] : memref<1x4xf32, #tpu.memory_space<vmem>>, vector<1x4xf32>
    %115 = vector.broadcast %114 : vector<1x4xf32> to vector<128x4xf32>
    %116 = arith.addf %113, %115 : vector<128x4xf32>
    %117 = arith.negf %116 : vector<128x4xf32>
    %118 = math.exp %117 : vector<128x4xf32>
    %cst_26 = arith.constant 1.000000e+00 : f32
    %119 = vector.broadcast %cst_26 : f32 to vector<128x4xf32>
    %120 = arith.addf %119, %118 : vector<128x4xf32>
    %121 = arith.divf %119, %120 : vector<128x4xf32>
    %c0_27 = arith.constant 0 : index
    %c0_28 = arith.constant 0 : index
    %c0_29 = arith.constant 0 : index
    %122 = vector.load %arg8[%c0_27, %c0_28, %c0_29] : memref<1x128x4xf32, #tpu.memory_space<vmem>>, vector<1x128x4xf32>
    %123 = vector.shape_cast %122 : vector<1x128x4xf32> to vector<128x4xf32>
    %124 = vector.shape_cast %121 : vector<128x4xf32> to vector<1x128x4xf32>
    tpu.vector_store %arg8[%c0_27, %c0_28, %c0_29], %124 {strides = array<i32>} : memref<1x128x4xf32, #tpu.memory_space<vmem>>, vector<1x128x4xf32>,
    %c1 = arith.constant 1 : index
    %c0_30 = arith.constant 0 : index
    %c0_31 = arith.constant 0 : index
    %c0_32 = arith.constant 0 : index
    %125 = vector.load %arg3[%c1, %c0_30, %c0_31, %c0_32] : memref<2x3x3x128xf32, #tpu.memory_space<vmem>>, vector<1x3x3x128xf32>
    %126 = vector.shape_cast %125 : vector<1x3x3x128xf32> to vector<3x3x128xf32>
    %127 = vector.extract_strided_slice %126 {offsets = [0, 0, 0], sizes = [1, 1, 128], strides = [1, 1, 1]} : vector<3x3x128xf32> to vector<1x1x128xf32>
    %128 = vector.shape_cast %127 : vector<1x1x128xf32> to vector<128xf32>
    %129 = vector.shape_cast %128 : vector<128xf32> to vector<1x1x128xf32>
    %130 = vector.broadcast %129 : vector<1x1x128xf32> to vector<8x16x128xf32>
    %131 = arith.mulf %40, %130 : vector<8x16x128xf32>
    %132 = vector.extract_strided_slice %126 {offsets = [0, 1, 0], sizes = [1, 1, 128], strides = [1, 1, 1]} : vector<3x3x128xf32> to vector<1x1x128xf32>
    %133 = vector.shape_cast %132 : vector<1x1x128xf32> to vector<128xf32>
    %134 = vector.shape_cast %133 : vector<128xf32> to vector<1x1x128xf32>
    %135 = vector.broadcast %134 : vector<1x1x128xf32> to vector<8x16x128xf32>
    %136 = arith.mulf %26, %135 : vector<8x16x128xf32>
    %137 = arith.addf %131, %136 : vector<8x16x128xf32>
    %138 = vector.extract_strided_slice %126 {offsets = [0, 2, 0], sizes = [1, 1, 128], strides = [1, 1, 1]} : vector<3x3x128xf32> to vector<1x1x128xf32>
    %139 = vector.shape_cast %138 : vector<1x1x128xf32> to vector<128xf32>
    %140 = vector.shape_cast %139 : vector<128xf32> to vector<1x1x128xf32>
    %141 = vector.broadcast %140 : vector<1x1x128xf32> to vector<8x16x128xf32>
    %142 = arith.mulf %43, %141 : vector<8x16x128xf32>
    %143 = arith.addf %137, %142 : vector<8x16x128xf32>
    %144 = vector.extract_strided_slice %126 {offsets = [1, 0, 0], sizes = [1, 1, 128], strides = [1, 1, 1]} : vector<3x3x128xf32> to vector<1x1x128xf32>
    %145 = vector.shape_cast %144 : vector<1x1x128xf32> to vector<128xf32>
    %146 = vector.shape_cast %145 : vector<128xf32> to vector<1x1x128xf32>
    %147 = vector.broadcast %146 : vector<1x1x128xf32> to vector<8x16x128xf32>
    %148 = arith.mulf %46, %147 : vector<8x16x128xf32>
    %149 = arith.addf %143, %148 : vector<8x16x128xf32>
    %150 = vector.extract_strided_slice %126 {offsets = [1, 1, 0], sizes = [1, 1, 128], strides = [1, 1, 1]} : vector<3x3x128xf32> to vector<1x1x128xf32>
    %151 = vector.shape_cast %150 : vector<1x1x128xf32> to vector<128xf32>
    %152 = vector.shape_cast %151 : vector<128xf32> to vector<1x1x128xf32>
    %153 = vector.broadcast %152 : vector<1x1x128xf32> to vector<8x16x128xf32>
    %154 = arith.mulf %4, %153 : vector<8x16x128xf32>
    %155 = arith.addf %149, %154 : vector<8x16x128xf32>
    %156 = vector.extract_strided_slice %126 {offsets = [1, 2, 0], sizes = [1, 1, 128], strides = [1, 1, 1]} : vector<3x3x128xf32> to vector<1x1x128xf32>
    %157 = vector.shape_cast %156 : vector<1x1x128xf32> to vector<128xf32>
    %158 = vector.shape_cast %157 : vector<128xf32> to vector<1x1x128xf32>
    %159 = vector.broadcast %158 : vector<1x1x128xf32> to vector<8x16x128xf32>
    %160 = arith.mulf %49, %159 : vector<8x16x128xf32>
    %161 = arith.addf %155, %160 : vector<8x16x128xf32>
    %162 = vector.extract_strided_slice %126 {offsets = [2, 0, 0], sizes = [1, 1, 128], strides = [1, 1, 1]} : vector<3x3x128xf32> to vector<1x1x128xf32>
    %163 = vector.shape_cast %162 : vector<1x1x128xf32> to vector<128xf32>
    %164 = vector.shape_cast %163 : vector<128xf32> to vector<1x1x128xf32>
    %165 = vector.broadcast %164 : vector<1x1x128xf32> to vector<8x16x128xf32>
    %166 = arith.mulf %52, %165 : vector<8x16x128xf32>
    %167 = arith.addf %161, %166 : vector<8x16x128xf32>
    %168 = vector.extract_strided_slice %126 {offsets = [2, 1, 0], sizes = [1, 1, 128], strides = [1, 1, 1]} : vector<3x3x128xf32> to vector<1x1x128xf32>
    %169 = vector.shape_cast %168 : vector<1x1x128xf32> to vector<128xf32>
    %170 = vector.shape_cast %169 : vector<128xf32> to vector<1x1x128xf32>
    %171 = vector.broadcast %170 : vector<1x1x128xf32> to vector<8x16x128xf32>
    %172 = arith.mulf %28, %171 : vector<8x16x128xf32>
    %173 = arith.addf %167, %172 : vector<8x16x128xf32>
    %174 = vector.extract_strided_slice %126 {offsets = [2, 2, 0], sizes = [1, 1, 128], strides = [1, 1, 1]} : vector<3x3x128xf32> to vector<1x1x128xf32>
    %175 = vector.shape_cast %174 : vector<1x1x128xf32> to vector<128xf32>
    %176 = vector.shape_cast %175 : vector<128xf32> to vector<1x1x128xf32>
    %177 = vector.broadcast %176 : vector<1x1x128xf32> to vector<8x16x128xf32>
    %178 = arith.mulf %55, %177 : vector<8x16x128xf32>
    %179 = arith.addf %173, %178 : vector<8x16x128xf32>
    %180 = vector.shape_cast %179 : vector<8x16x128xf32> to vector<128x128xf32>
    %c0_33 = arith.constant 0 : index
    %c0_34 = arith.constant 0 : index
    %181 = vector.load %arg6[%c0_33, %c0_34] : memref<128x4xf32, #tpu.memory_space<vmem>>, vector<128x4xf32>
    %cst_35 = arith.constant dense<0.000000e+00> : vector<128x4xf32>
    %182 = tpu.matmul %180, %181, %cst_35 {dimension_numbers = #tpu.dot_dimension_numbers<[1], [0], [0], [1], [0, 0, 1, 1], [], []>} : vector<128x128xf32>, vector<128x4xf32>, vector<128x4xf32> -> vector<128x4xf32>
    %c0_36 = arith.constant 0 : index
    %c0_37 = arith.constant 0 : index
    %183 = vector.load %arg7[%c0_36, %c0_37] : memref<1x4xf32, #tpu.memory_space<vmem>>, vector<1x4xf32>
    %184 = vector.broadcast %183 : vector<1x4xf32> to vector<128x4xf32>
    %185 = arith.addf %182, %184 : vector<128x4xf32>
    %c0_38 = arith.constant 0 : index
    %c0_39 = arith.constant 0 : index
    %c0_40 = arith.constant 0 : index
    %186 = vector.load %arg9[%c0_38, %c0_39, %c0_40] : memref<1x128x4xf32, #tpu.memory_space<vmem>>, vector<1x128x4xf32>
    %187 = vector.shape_cast %186 : vector<1x128x4xf32> to vector<128x4xf32>
    %188 = vector.shape_cast %185 : vector<128x4xf32> to vector<1x128x4xf32>
    tpu.vector_store %arg9[%c0_38, %c0_39, %c0_40], %188 {strides = array<i32>} : memref<1x128x4xf32, #tpu.memory_space<vmem>>, vector<1x128x4xf32>,
    return
  }
  func.func @transform_0(%arg0: i32, %arg1: i32) -> (i32, i32, i32, i32) {
    %c0_i32 = arith.constant 0 : i32
    %c0_i32_0 = arith.constant 0 : i32
    %c0_i32_1 = arith.constant 0 : i32
    %c0_i32_2 = arith.constant 0 : i32
    return %arg0, %c0_i32, %c0_i32_0, %c0_i32_1 : i32, i32, i32, i32
  }
  func.func @transform_1(%arg0: i32, %arg1: i32) -> (i32, i32, i32, i32) {
    %c0_i32 = arith.constant 0 : i32
    %c0_i32_0 = arith.constant 0 : i32
    %c0_i32_1 = arith.constant 0 : i32
    %c0_i32_2 = arith.constant 0 : i32
    %c0_i32_3 = arith.constant 0 : i32
    return %c0_i32, %c0_i32_0, %c0_i32_1, %c0_i32_2 : i32, i32, i32, i32
  }
  func.func @transform_2(%arg0: i32, %arg1: i32) -> (i32, i32) {
    %c0_i32 = arith.constant 0 : i32
    %c0_i32_0 = arith.constant 0 : i32
    %c0_i32_1 = arith.constant 0 : i32
    return %c0_i32, %c0_i32_0 : i32, i32
  }
  func.func @transform_3(%arg0: i32, %arg1: i32) -> (i32, i32) {
    %c0_i32 = arith.constant 0 : i32
    %c0_i32_0 = arith.constant 0 : i32
    %c0_i32_1 = arith.constant 0 : i32
    return %c0_i32, %c0_i32_0 : i32, i32
  }
  func.func @transform_4(%arg0: i32, %arg1: i32) -> (i32, i32) {
    %c0_i32 = arith.constant 0 : i32
    %c0_i32_0 = arith.constant 0 : i32
    %c0_i32_1 = arith.constant 0 : i32
    return %c0_i32, %c0_i32_0 : i32, i32
  }
  func.func @transform_5(%arg0: i32, %arg1: i32) -> (i32, i32) {
    %c0_i32 = arith.constant 0 : i32
    %c0_i32_0 = arith.constant 0 : i32
    %c0_i32_1 = arith.constant 0 : i32
    return %c0_i32, %c0_i32_0 : i32, i32
  }
  func.func @transform_6(%arg0: i32, %arg1: i32) -> (i32, i32, i32) {
    %c0_i32 = arith.constant 0 : i32
    %c0_i32_0 = arith.constant 0 : i32
    return %arg0, %arg1, %c0_i32 : i32, i32, i32
  }
  func.func @transform_7(%arg0: i32, %arg1: i32) -> (i32, i32, i32) {
    %c0_i32 = arith.constant 0 : i32
    %c0_i32_0 = arith.constant 0 : i32
    return %arg0, %arg1, %c0_i32 : i32, i32, i32
  }
}

</mosaic_0001>

<llo_original>
// kernel: centernet_head_forward.1
$region0: #{centernet_head_forward.1}
  #allocation0 [shape = 'u32[]', space=smem, size = 0x4, offset = 0x4, fixed_abs, tag = 'smem constant byte address 0x4 - core index']
  #allocation1 [shape = 'u32[72,128]{1,0:T(1,128)}', space=vmem, size = 0x9000, scoped, tag = 'internal scratch']
  %s0 = inlined_call_operand.hbm [shape: f32[2,16,16,128], index: 0, kind: input, shape index: {}]
  %s1 = inlined_call_operand.vmem [shape: f32[2,3,3,128], index: 1, kind: input, shape index: {}]
  %s2 = inlined_call_operand.vmem [shape: f32[128,4], index: 2, kind: input, shape index: {}]
  %s3 = inlined_call_operand.vmem [shape: f32[1,4], index: 3, kind: input, shape index: {}]
  %s4 = inlined_call_operand.vmem [shape: f32[128,4], index: 4, kind: input, shape index: {}]
  %s5 = inlined_call_operand.vmem [shape: f32[1,4], index: 5, kind: input, shape index: {}]
  %s6 = inlined_call_operand.vmem [shape: f32[2,256,4], index: 6, kind: output, shape index: {0}]
  %s7 = inlined_call_operand.vmem [shape: f32[2,256,4], index: 7, kind: output, shape index: {1}]
  %8 = xla_tuple %s6, %s7
  %s9 = sld [smem:[#allocation0]]
  $region69: #{centernet_head_forward.1} parent=0
    _
  %s11 = ssub.s32 1, %s9
  %s12 = scalar_select 0, %s11, %s9
  $region1: #{centernet_head_forward.1} parent=0
    #allocation2 [shape = 'u8[262144]{0}', space=vmem, size = 0x40000, scoped, tag = 'input window, operand 0']
    #allocation3 [shape = 's32[2]{0}', space=sflag, size = 0x8, scoped, tag = 'scoped memory for centernet_head_forward.1']
    %13 = vsyncpa [#allocation3], 0
    %s14 = scalar_lea.sflag [#allocation3], 1
    %15 = vsyncpa %s14, 0
    loop: start=0, step=1, limit=6
    $region2: #{centernet_head_forward.1} parent=1 // loop_pre_header
      _
    $region3: #{centernet_head_forward.1} parent=1 // loop_header
      %s17 = sphi 0, %s21
      %p18 = scmp.ge.s32.totalorder %s17, 6
      %s24 = sphi 0, %s36
      %s25 = sphi 0, %s32
      %s26 = sphi 0, %s24
      %s27 = sphi 0, %s25
      %s28 = sphi 0, %s26
      %s29 = sphi 0, %s27
      %s39 = sphi 0, %s41
      %s42 = sphi 0, %s39
      %s43 = sphi 0, %s42
      %s59 = sphi 0, %s43
      %s63 = sphi 0, %s63
      %s65 = sphi 0, %s63
      %s66 = sphi 0, %s65
      %s80 = sphi 0, %s66
      %s84 = sphi 0, %s84
      %s86 = sphi 0, %s84
      %s87 = sphi 0, %s86
      %s101 = sphi 0, %s87
      %s105 = sphi 0, %s105
      %s107 = sphi 0, %s105
      %s108 = sphi 0, %s107
      %s122 = sphi 0, %s108
      %s126 = sphi 0, %s126
      %s128 = sphi 0, %s126
      %s129 = sphi 0, %s128
      %s143 = sphi 0, %s129
      %s147 = sphi 0, %s147
      %s149 = sphi 0, %s147
      %s150 = sphi 0, %s149
      %s164 = sphi 0, %s150
      %s172 = sphi 0, %s174
      %s175 = sphi 0, %s172
      %s176 = sphi 0, %s175
      %s192 = sphi 0, %s176
      %s200 = sphi 0, %s202
      %s203 = sphi 0, %s200
      %s204 = sphi 0, %s203
      %s220 = sphi 0, %s204
    $region4: #{centernet_head_forward.1} parent=1 // loop_header_branch
      %20 = sbr.rel (%p18) target = $region8
    $region5: #{centernet_head_forward.1} parent=1 // loop_body
      %s22 = ssub.s32 %s17, 1
      %s23 = ssub.s32 %s17, 2
      %s30 = sadd.s32 1, %s25
      %p31 = scmp.ge.s32.totalorder %s30, 2
      %s32 = scalar_select %p31, 0, %s30
      %s33 = sadd.s32 1, %s24
      %s34 = scalar_select %p31, %s33, %s24
      %p35 = scmp.ge.s32.totalorder %s34, 2
      %s36 = scalar_select %p35, 0, %s34
      %s37 = ssub.s32 %s24, %s36
      %p38 = scmp.eq.s32.totalorder %s37, 0
      %s40 = sadd.s32 %s39, 1
      %s41 = scalar_select %p38, %s39, %s40
      %p44 = pneg %p38
      %p45 = scmp.eq.s32.totalorder %s17, 3
      %p46 = por %p44, %p45
      %p47 = scmp.ne.s32.totalorder %s39, %s42
      %p48 = scmp.eq.s32.totalorder %s17, 0
      %p49 = por %p47, %p48
      %p50 = scmp.ne.s32.totalorder %s39, %s42
      %p51 = scmp.eq.s32.totalorder %s22, 3
      %p52 = por %p50, %p51
      %p53 = scmp.ne.s32.totalorder %s42, %s43
      %p54 = scmp.eq.s32.totalorder %s22, 0
      %p55 = por %p53, %p54
      %p56 = scmp.ne.s32.totalorder %s42, %s43
      %p57 = scmp.eq.s32.totalorder %s23, 3
      %p58 = por %p56, %p57
      %p60 = scmp.ne.s32.totalorder %s43, %s59
      %p61 = scmp.eq.s32.totalorder %s23, 0
      %p62 = por %p60, %p61
      %s64 = sadd.s32 %s63, 1
      %p67 = scmp.eq.s32.totalorder %s17, 3
      %p68 = scmp.ne.s32.totalorder %s63, %s65
      %p69 = scmp.eq.s32.totalorder %s17, 0
      %p70 = por %p68, %p69
      %p71 = scmp.ne.s32.totalorder %s63, %s65
      %p72 = scmp.eq.s32.totalorder %s22, 3
      %p73 = por %p71, %p72
      %p74 = scmp.ne.s32.totalorder %s65, %s66
      %p75 = scmp.eq.s32.totalorder %s22, 0
      %p76 = por %p74, %p75
      %p77 = scmp.ne.s32.totalorder %s65, %s66
      %p78 = scmp.eq.s32.totalorder %s23, 3
      %p79 = por %p77, %p78
      %p81 = scmp.ne.s32.totalorder %s66, %s80
      %p82 = scmp.eq.s32.totalorder %s23, 0
      %p83 = por %p81, %p82
      %s85 = sadd.s32 %s84, 1
      %p88 = scmp.eq.s32.totalorder %s17, 3
      %p89 = scmp.ne.s32.totalorder %s84, %s86
      %p90 = scmp.eq.s32.totalorder %s17, 0
      %p91 = por %p89, %p90
      %p92 = scmp.ne.s32.totalorder %s84, %s86
      %p93 = scmp.eq.s32.totalorder %s22, 3
      %p94 = por %p92, %p93
      %p95 = scmp.ne.s32.totalorder %s86, %s87
      %p96 = scmp.eq.s32.totalorder %s22, 0
      %p97 = por %p95, %p96
      %p98 = scmp.ne.s32.totalorder %s86, %s87
      %p99 = scmp.eq.s32.totalorder %s23, 3
      %p100 = por %p98, %p99
      %p102 = scmp.ne.s32.totalorder %s87, %s101
      %p103 = scmp.eq.s32.totalorder %s23, 0
      %p104 = por %p102, %p103
      %s106 = sadd.s32 %s105, 1
      %p109 = scmp.eq.s32.totalorder %s17, 3
      %p110 = scmp.ne.s32.totalorder %s105, %s107
      %p111 = scmp.eq.s32.totalorder %s17, 0
      %p112 = por %p110, %p111
      %p113 = scmp.ne.s32.totalorder %s105, %s107
      %p114 = scmp.eq.s32.totalorder %s22, 3
      %p115 = por %p113, %p114
      %p116 = scmp.ne.s32.totalorder %s107, %s108
      %p117 = scmp.eq.s32.totalorder %s22, 0
      %p118 = por %p116, %p117
      %p119 = scmp.ne.s32.totalorder %s107, %s108
      %p120 = scmp.eq.s32.totalorder %s23, 3
      %p121 = por %p119, %p120
      %p123 = scmp.ne.s32.totalorder %s108, %s122
      %p124 = scmp.eq.s32.totalorder %s23, 0
      %p125 = por %p123, %p124
      %s127 = sadd.s32 %s126, 1
      %p130 = scmp.eq.s32.totalorder %s17, 3
      %p131 = scmp.ne.s32.totalorder %s126, %s128
      %p132 = scmp.eq.s32.totalorder %s17, 0
      %p133 = por %p131, %p132
      %p134 = scmp.ne.s32.totalorder %s126, %s128
      %p135 = scmp.eq.s32.totalorder %s22, 3
      %p136 = por %p134, %p135
      %p137 = scmp.ne.s32.totalorder %s128, %s129
      %p138 = scmp.eq.s32.totalorder %s22, 0
      %p139 = por %p137, %p138
      %p140 = scmp.ne.s32.totalorder %s128, %s129
      %p141 = scmp.eq.s32.totalorder %s23, 3
      %p142 = por %p140, %p141
      %p144 = scmp.ne.s32.totalorder %s129, %s143
      %p145 = scmp.eq.s32.totalorder %s23, 0
      %p146 = por %p144, %p145
      %s148 = sadd.s32 %s147, 1
      %p151 = scmp.eq.s32.totalorder %s17, 3
      %p152 = scmp.ne.s32.totalorder %s147, %s149
      %p153 = scmp.eq.s32.totalorder %s17, 0
      %p154 = por %p152, %p153
      %p155 = scmp.ne.s32.totalorder %s147, %s149
      %p156 = scmp.eq.s32.totalorder %s22, 3
      %p157 = por %p155, %p156
      %p158 = scmp.ne.s32.totalorder %s149, %s150
      %p159 = scmp.eq.s32.totalorder %s22, 0
      %p160 = por %p158, %p159
      %p161 = scmp.ne.s32.totalorder %s149, %s150
      %p162 = scmp.eq.s32.totalorder %s23, 3
      %p163 = por %p161, %p162
      %p165 = scmp.ne.s32.totalorder %s150, %s164
      %p166 = scmp.eq.s32.totalorder %s23, 0
      %p167 = por %p165, %p166
      %s168 = ssub.s32 %s24, %s36
      %s169 = ssub.s32 %s25, %s32
      %s170 = sor.u32 %s168, %s169
      %p171 = scmp.eq.s32.totalorder %s170, 0
      %s173 = sadd.s32 %s172, 1
      %s174 = scalar_select %p171, %s172, %s173
      %p177 = pneg %p171
      %p178 = scmp.eq.s32.totalorder %s17, 3
      %p179 = por %p177, %p178
      %p180 = scmp.ne.s32.totalorder %s172, %s175
      %p181 = scmp.eq.s32.totalorder %s17, 0
      %p182 = por %p180, %p181
      %p183 = scmp.ne.s32.totalorder %s172, %s175
      %p184 = scmp.eq.s32.totalorder %s22, 3
      %p185 = por %p183, %p184
      %p186 = scmp.ne.s32.totalorder %s175, %s176
      %p187 = scmp.eq.s32.totalorder %s22, 0
      %p188 = por %p186, %p187
      %p189 = scmp.ne.s32.totalorder %s175, %s176
      %p190 = scmp.eq.s32.totalorder %s23, 3
      %p191 = por %p189, %p190
      %p193 = scmp.ne.s32.totalorder %s176, %s192
      %p194 = scmp.eq.s32.totalorder %s23, 0
      %p195 = por %p193, %p194
      %s196 = ssub.s32 %s24, %s36
      %s197 = ssub.s32 %s25, %s32
      %s198 = sor.u32 %s196, %s197
      %p199 = scmp.eq.s32.totalorder %s198, 0
      %s201 = sadd.s32 %s200, 1
      %s202 = scalar_select %p199, %s200, %s201
      %p205 = pneg %p199
      %p206 = scmp.eq.s32.totalorder %s17, 3
      %p207 = por %p205, %p206
      %p208 = scmp.ne.s32.totalorder %s200, %s203
      %p209 = scmp.eq.s32.totalorder %s17, 0
      %p210 = por %p208, %p209
      %p211 = scmp.ne.s32.totalorder %s200, %s203
      %p212 = scmp.eq.s32.totalorder %s22, 3
      %p213 = por %p211, %p212
      %p214 = scmp.ne.s32.totalorder %s203, %s204
      %p215 = scmp.eq.s32.totalorder %s22, 0
      %p216 = por %p214, %p215
      %p217 = scmp.ne.s32.totalorder %s203, %s204
      %p218 = scmp.eq.s32.totalorder %s23, 3
      %p219 = por %p217, %p218
      %p221 = scmp.ne.s32.totalorder %s204, %s220
      %p222 = scmp.eq.s32.totalorder %s23, 0
      %p223 = por %p221, %p222
      %p224 = scmp.le.s32.totalorder 1, %s17
      %p225 = scmp.lt.s32.totalorder %s17, 5
      %p226 = pnand %p224, %p225
      %p227 = pneg %p226
      // Predicated region
      $region9: #{centernet_head_forward.1} parent=5 // pred_check
        _
      $region10: #{centernet_head_forward.1} parent=5 // pred_check_branch
        %229 = sbr.rel (%p226) target = $region12
      $region11: #{centernet_head_forward.1} parent=5 // pred_region
        %s230 = ssub.s32 %s17, 1
        // Predicated region
        $region13: #{centernet_head_forward.1} parent=11 // pred_check
          %p231 = pneg %p76
        $region14: #{centernet_head_forward.1} parent=11 // pred_check_branch
          %233 = sbr.rel (%p231) target = $region16
        $region15: #{centernet_head_forward.1} parent=11 // pred_region
          _
        $region16: #{centernet_head_forward.1} parent=11 // pred_fallthru
          _
        // Predicated region
        $region17: #{centernet_head_forward.1} parent=11 // pred_check
          %p234 = pneg %p97
        $region18: #{centernet_head_forward.1} parent=11 // pred_check_branch
          %236 = sbr.rel (%p234) target = $region20
        $region19: #{centernet_head_forward.1} parent=11 // pred_region
          _
        $region20: #{centernet_head_forward.1} parent=11 // pred_fallthru
          _
        // Predicated region
        $region21: #{centernet_head_forward.1} parent=11 // pred_check
          %p237 = pneg %p118
        $region22: #{centernet_head_forward.1} parent=11 // pred_check_branch
          %239 = sbr.rel (%p237) target = $region24
        $region23: #{centernet_head_forward.1} parent=11 // pred_region
          _
        $region24: #{centernet_head_forward.1} parent=11 // pred_fallthru
          _
        // Predicated region
        $region25: #{centernet_head_forward.1} parent=11 // pred_check
          %p240 = pneg %p139
        $region26: #{centernet_head_forward.1} parent=11 // pred_check_branch
          %242 = sbr.rel (%p240) target = $region28
        $region27: #{centernet_head_forward.1} parent=11 // pred_region
          _
        $region28: #{centernet_head_forward.1} parent=11 // pred_fallthru
          _
        // Predicated region
        $region29: #{centernet_head_forward.1} parent=11 // pred_check
          %p243 = pneg %p160
        $region30: #{centernet_head_forward.1} parent=11 // pred_check_branch
          %245 = sbr.rel (%p243) target = $region32
        $region31: #{centernet_head_forward.1} parent=11 // pred_region
          _
        $region32: #{centernet_head_forward.1} parent=11 // pred_fallthru
          _
      $region12: #{centernet_head_forward.1} parent=5 // pred_fallthru
        _
      %p246 = scmp.lt.s32.totalorder %s17, 4
      // Predicated region
      $region33: #{centernet_head_forward.1} parent=5 // pred_check
        %p247 = pneg %p246
      $region34: #{centernet_head_forward.1} parent=5 // pred_check_branch
        %249 = sbr.rel (%p247) target = $region36
      $region35: #{centernet_head_forward.1} parent=5 // pred_region
        // Predicated region
        $region37: #{centernet_head_forward.1} parent=35 // pred_check
          %p250 = pneg %p49
        $region38: #{centernet_head_forward.1} parent=35 // pred_check_branch
          %252 = sbr.rel (%p250) target = $region40
        $region39: #{centernet_head_forward.1} parent=35 // pred_region
          %s253 = sand.u32 %s39, 1
          %s254 = scalar_lea.sflag [#allocation3], %s253
          %s255 = sand.u32 %s39, 1
          %s256 = smul.addr %s255, 256
          %s257 = scalar_lea.vmem [#allocation2], %s256
          %259 = vsyncadd %s254, 0
          %s260 = smul.addr %s24, 32
          %s261 = smul.addr %s260, 8
          %s262 = scalar_lea.hbm %s0, %s261
          %s263 = sshll.u32 %s262, 4
          %s264 = int_to_ptr.hbm [resolvable:$true] %s263
          %s265 = sshll.u32 %s257, 4
          %s266 = int_to_ptr.vmem [resolvable:$true] %s265
          %271 = dma.hbm_to_vmem [thread:$0]  %s264, 4096, %s266, %s254, 128, 128, 8
        $region40: #{centernet_head_forward.1} parent=35 // pred_fallthru
          _
      $region36: #{centernet_head_forward.1} parent=5 // pred_fallthru
        _
      %p272 = scmp.le.s32.totalorder 1, %s17
      %p273 = scmp.lt.s32.totalorder %s17, 5
      %p274 = pnand %p272, %p273
      %p275 = pneg %p274
      // Predicated region
      $region41: #{centernet_head_forward.1} parent=5 // pred_check
        _
      $region42: #{centernet_head_forward.1} parent=5 // pred_check_branch
        %277 = sbr.rel (%p274) target = $region44
      $region43: #{centernet_head_forward.1} parent=5 // pred_region
        %s278 = ssub.s32 %s17, 1
        %s279 = sand.u32 %s42, 1
        %s280 = scalar_lea.sflag [#allocation3], %s279
        %s281 = sand.u32 %s42, 1
        %s282 = smul.addr %s281, 256
        %s283 = scalar_lea.vmem [#allocation2], %s282
        // Predicated region
        $region45: #{centernet_head_forward.1} parent=43 // pred_check
          %p284 = pneg %p55
        $region46: #{centernet_head_forward.1} parent=43 // pred_check_branch
          %286 = sbr.rel (%p284) target = $region48
        $region47: #{centernet_head_forward.1} parent=43 // pred_region
          %288 = dma.done %s280, 4096
        $region48: #{centernet_head_forward.1} parent=43 // pred_fallthru
          _
        %s289 = sand.u32 %s42, 1
        %s290 = scalar_lea.sflag [#allocation3], %s289
        %s291 = sand.u32 %s42, 1
        %s292 = smul.addr %s291, 256
        %s293 = scalar_lea.vmem [#allocation2], %s292
        %p294 = pneg %p55
        %p295 = pneg %p52
        %p296 = pneg %p76
        %p297 = pneg %p73
        %p298 = pneg %p97
        %p299 = pneg %p94
        %p300 = pneg %p118
        %p301 = pneg %p115
        %p302 = pneg %p139
        %p303 = pneg %p136
        %p304 = pneg %p160
        %p305 = pneg %p157
        %p306 = pneg %p188
        %p307 = pneg %p185
        %s308 = smul.u32 16, %s27
        %p309 = scmp.lt.s32.totalorder %s26, 1
        %s310 = scalar_select %p309, %s26, 1
        %p311 = scmp.lt.s32.totalorder %s308, 31
        %s312 = scalar_select %p311, %s308, 31
        %s313 = smul.addr %s310, 32
        %s314 = sadd.s32 %s312, %s313
        %s315 = smul.addr %s314, 8
        %s316 = scalar_lea.vmem %s6, %s315
        %p317 = pneg %p216
        %p318 = pneg %p213
        %s319 = smul.u32 16, %s27
        %p320 = scmp.lt.s32.totalorder %s26, 1
        %s321 = scalar_select %p320, %s26, 1
        %p322 = scmp.lt.s32.totalorder %s319, 31
        %s323 = scalar_select %p322, %s319, 31
        %s324 = smul.addr %s321, 32
        %s325 = sadd.s32 %s323, %s324
        %s326 = smul.addr %s325, 8
        %s327 = scalar_lea.vmem %s7, %s326
        %s328 = smul.u32 16, %s27
        %p329 = scmp.lt.s32.totalorder %s26, 1
        %s330 = scalar_select %p329, %s26, 1
        %p331 = scmp.lt.s32.totalorder %s328, 31
        %s332 = scalar_select %p331, %s328, 31
        %s333 = smul.addr %s330, 32
        %s334 = sadd.s32 %s332, %s333
        %s335 = smul.addr %s334, 8
        %s336 = scalar_lea.vmem %s6, %s335
        %s337 = smul.u32 16, %s27
        %s338 = smul.u32 16, %s27
        %p339 = scmp.lt.s32.totalorder %s26, 1
        %s340 = scalar_select %p339, %s26, 1
        %p341 = scmp.lt.s32.totalorder %s338, 31
        %s342 = scalar_select %p341, %s338, 31
        %s343 = smul.addr %s340, 32
        %s344 = sadd.s32 %s342, %s343
        %s345 = smul.addr %s344, 8
        %s346 = scalar_lea.vmem %s7, %s345
        %s347 = smul.u32 16, %s27
        %s348 = smul.u32 %s27, 8
        %s349 = smul.u32 %s348, 16
        %s350 = scalar_lea.vmem %s283, %s349 [#allocation2]
        %v351 = vld [vmem:[%s350] sm:$0xff]
        %v352 = vld [vmem:[%s350 + $0x8] sm:$0xff]
        %v353 = vld [vmem:[%s350 + $0x10] sm:$0xff]
        %v354 = vld [vmem:[%s350 + $0x18] sm:$0xff]
        %v355 = vld [vmem:[%s350 + $0x20] sm:$0xff]
        %v356 = vld [vmem:[%s350 + $0x28] sm:$0xff]
        %v357 = vld [vmem:[%s350 + $0x30] sm:$0xff]
        %v358 = vld [vmem:[%s350 + $0x38] sm:$0xff]
        %v359 = vld [vmem:[%s350 + $0x40] sm:$0xff]
        %v360 = vld [vmem:[%s350 + $0x48] sm:$0xff]
        %v361 = vld [vmem:[%s350 + $0x50] sm:$0xff]
        %v362 = vld [vmem:[%s350 + $0x58] sm:$0xff]
        %v363 = vld [vmem:[%s350 + $0x60] sm:$0xff]
        %v364 = vld [vmem:[%s350 + $0x68] sm:$0xff]
        %v365 = vld [vmem:[%s350 + $0x70] sm:$0xff]
        %v366 = vld [vmem:[%s350 + $0x78] sm:$0xff]
        %p367 = scmp.gt.s32.totalorder %s27, 0
        %s368 = scalar_select %p367, 1, 0
        %s369 = scvt.s32.f32 %s368
        %p370 = scmp.lt.s32.totalorder %s27, 1
        %s371 = scalar_select %p370, 1, 0
        %s372 = scvt.s32.f32 %s371
        %s373 = ssub.s32 %s348, 1
        %p374 = scmp.gt.s32.totalorder %s373, 0
        %s375 = scalar_select %p374, %s373, 0
        %s376 = smul.u32 %s375, 16
        %s377 = scalar_lea.vmem %s283, %s376 [#allocation2]
        %v378 = vld [vmem:[%s377] sm:$0xff]
        %v379 = vld [vmem:[%s377 + $0x8] sm:$0xff]
        %v380 = vstv %s369
        %v381 = vmul.f32 %v378, %v380
        %v382 = vmul.f32 %v379, %v380
        %s383 = sadd.s32 %s348, 8
        %p384 = scmp.lt.s32.totalorder %s383, 15
        %s385 = scalar_select %p384, %s383, 15
        %s386 = smul.u32 %s385, 16
        %s387 = scalar_lea.vmem %s283, %s386 [#allocation2]
        %v388 = vld [vmem:[%s387] sm:$0xff]
        %v389 = vld [vmem:[%s387 + $0x8] sm:$0xff]
        %v390 = vstv %s372
        %v391 = vmul.f32 %v388, %v390
        %v392 = vmul.f32 %v389, %v390
        %v393 = vlaneseq
        %v394 = vshrl.u32 %v393, 7
        %v395 = vadd.s32 %v394, 8
        %vm396 = vcmp.ge.s32.totalorder %v394, 1
        %vm397 = vcmp.ge.s32.totalorder %v395, 1
        %v398 = vsel %vm396, 1, 0
        %v399 = vsel %vm397, 1, 0
        %v400 = vcvt.s32.f32 %v398
        %v401 = vcvt.s32.f32 %v399
        %vm402 = vcmp.le.s32.totalorder %v394, 14
        %vm403 = vcmp.le.s32.totalorder %v395, 14
        %v404 = vsel %vm402, 1, 0
        %v405 = vsel %vm403, 1, 0
        %v406 = vcvt.s32.f32 %v404
        %v407 = vcvt.s32.f32 %v405
        %v408 = vrot.slane %v381, 7
        %v409 = vrot.slane %v351, 7
        %v410 = vrot.slane %v353, 7
        %v411 = vrot.slane %v355, 7
        %v412 = vrot.slane %v357, 7
        %v413 = vrot.slane %v359, 7
        %v414 = vrot.slane %v361, 7
        %v415 = vrot.slane %v363, 7
        %v416 = vrot.slane %v382, 7
        %v417 = vrot.slane %v352, 7
        %v418 = vrot.slane %v354, 7
        %v419 = vrot.slane %v356, 7
        %v420 = vrot.slane %v358, 7
        %v421 = vrot.slane %v360, 7
        %v422 = vrot.slane %v362, 7
        %v423 = vrot.slane %v364, 7
        %vm424 = vcmp.lt.s32.totalorder %v394, 1
        %v425 = vsel %vm424, %v408, %v416
        %v426 = vsel %vm424, %v409, %v417
        %v427 = vsel %vm424, %v410, %v418
        %v428 = vsel %vm424, %v411, %v419
        %v429 = vsel %vm424, %v412, %v420
        %v430 = vsel %vm424, %v413, %v421
        %v431 = vsel %vm424, %v414, %v422
        %v432 = vsel %vm424, %v415, %v423
        %v433 = vsel %vm424, %v416, %v408
        %v434 = vsel %vm424, %v417, %v409
        %v435 = vsel %vm424, %v418, %v410
        %v436 = vsel %vm424, %v419, %v411
        %v437 = vsel %vm424, %v420, %v412
        %v438 = vsel %vm424, %v421, %v413
        %v439 = vsel %vm424, %v422, %v414
        %v440 = vsel %vm424, %v423, %v415
        %v441 = vmul.f32 %v433, %v400
        %v442 = vmul.f32 %v425, %v401
        %v443 = vmul.f32 %v434, %v400
        %v444 = vmul.f32 %v426, %v401
        %v445 = vmul.f32 %v435, %v400
        %v446 = vmul.f32 %v427, %v401
        %v447 = vmul.f32 %v436, %v400
        %v448 = vmul.f32 %v428, %v401
        %v449 = vmul.f32 %v437, %v400
        %v450 = vmul.f32 %v429, %v401
        %v451 = vmul.f32 %v438, %v400
        %v452 = vmul.f32 %v430, %v401
        %v453 = vmul.f32 %v439, %v400
        %v454 = vmul.f32 %v431, %v401
        %v455 = vmul.f32 %v440, %v400
        %v456 = vmul.f32 %v432, %v401
        %v457 = vrot.slane %v381, 1
        %v458 = vrot.slane %v351, 1
        %v459 = vrot.slane %v353, 1
        %v460 = vrot.slane %v355, 1
        %v461 = vrot.slane %v357, 1
        %v462 = vrot.slane %v359, 1
        %v463 = vrot.slane %v361, 1
        %v464 = vrot.slane %v363, 1
        %v465 = vrot.slane %v382, 1
        %v466 = vrot.slane %v352, 1
        %v467 = vrot.slane %v354, 1
        %v468 = vrot.slane %v356, 1
        %v469 = vrot.slane %v358, 1
        %v470 = vrot.slane %v360, 1
        %v471 = vrot.slane %v362, 1
        %v472 = vrot.slane %v364, 1
        %vm473 = vcmp.lt.s32.totalorder %v394, 7
        %v474 = vsel %vm473, %v457, %v465
        %v475 = vsel %vm473, %v458, %v466
        %v476 = vsel %vm473, %v459, %v467
        %v477 = vsel %vm473, %v460, %v468
        %v478 = vsel %vm473, %v461, %v469
        %v479 = vsel %vm473, %v462, %v470
        %v480 = vsel %vm473, %v463, %v471
        %v481 = vsel %vm473, %v464, %v472
        %v482 = vsel %vm473, %v465, %v457
        %v483 = vsel %vm473, %v466, %v458
        %v484 = vsel %vm473, %v467, %v459
        %v485 = vsel %vm473, %v468, %v460
        %v486 = vsel %vm473, %v469, %v461
        %v487 = vsel %vm473, %v470, %v462
        %v488 = vsel %vm473, %v471, %v463
        %v489 = vsel %vm473, %v472, %v464
        %v490 = vmul.f32 %v474, %v406
        %v491 = vmul.f32 %v482, %v407
        %v492 = vmul.f32 %v475, %v406
        %v493 = vmul.f32 %v483, %v407
        %v494 = vmul.f32 %v476, %v406
        %v495 = vmul.f32 %v484, %v407
        %v496 = vmul.f32 %v477, %v406
        %v497 = vmul.f32 %v485, %v407
        %v498 = vmul.f32 %v478, %v406
        %v499 = vmul.f32 %v486, %v407
        %v500 = vmul.f32 %v479, %v406
        %v501 = vmul.f32 %v487, %v407
        %v502 = vmul.f32 %v480, %v406
        %v503 = vmul.f32 %v488, %v407
        %v504 = vmul.f32 %v481, %v406
        %v505 = vmul.f32 %v489, %v407
        %v506 = vrot.slane %v365, 7
        %v507 = vrot.slane %v366, 7
        %v508 = vsel %vm424, %v506, %v507
        %v509 = vsel %vm424, %v507, %v506
        %v510 = vmul.f32 %v509, %v400
        %v511 = vmul.f32 %v508, %v401
        %v512 = vrot.slane %v365, 1
        %v513 = vrot.slane %v366, 1
        %v514 = vsel %vm473, %v512, %v513
        %v515 = vsel %vm473, %v513, %v512
        %v516 = vmul.f32 %v514, %v406
        %v517 = vmul.f32 %v515, %v407
        %v518 = vrot.slane %v391, 7
        %v519 = vrot.slane %v392, 7
        %v520 = vsel %vm424, %v518, %v519
        %v521 = vsel %vm424, %v519, %v518
        %v522 = vmul.f32 %v521, %v400
        %v523 = vmul.f32 %v520, %v401
        %v524 = vrot.slane %v391, 1
        %v525 = vrot.slane %v392, 1
        %v526 = vsel %vm473, %v524, %v525
        %v527 = vsel %vm473, %v525, %v524
        %v528 = vmul.f32 %v526, %v406
        %v529 = vmul.f32 %v527, %v407
        %v530 = vld [vmem:[%s1] sm:$0x7]
        %v531 = vld [vmem:[%s1 + $0x4] sm:$0x7]
        %v532 = vld [vmem:[%s1 + $0x8] sm:$0x7]
        %v533 = vperm.slane %v530, 0
        %v534 = vmul.f32 %v441, %v533
        %v535 = vmul.f32 %v442, %v533
        %v536 = vmul.f32 %v443, %v533
        %v537 = vmul.f32 %v444, %v533
        %v538 = vmul.f32 %v445, %v533
        %v539 = vmul.f32 %v446, %v533
        %v540 = vmul.f32 %v447, %v533
        %v541 = vmul.f32 %v448, %v533
        %v542 = vmul.f32 %v449, %v533
        %v543 = vmul.f32 %v450, %v533
        %v544 = vmul.f32 %v451, %v533
        %v545 = vmul.f32 %v452, %v533
        %v546 = vmul.f32 %v453, %v533
        %v547 = vmul.f32 %v454, %v533
        %v548 = vmul.f32 %v455, %v533
        %v549 = vmul.f32 %v456, %v533
        %v550 = vperm.slane %v530, 1
        %v551 = vmul.f32 %v381, %v550
        %v552 = vmul.f32 %v382, %v550
        %v553 = vmul.f32 %v351, %v550
        %v554 = vmul.f32 %v352, %v550
        %v555 = vmul.f32 %v353, %v550
        %v556 = vmul.f32 %v354, %v550
        %v557 = vmul.f32 %v355, %v550
        %v558 = vmul.f32 %v356, %v550
        %v559 = vmul.f32 %v357, %v550
        %v560 = vmul.f32 %v358, %v550
        %v561 = vmul.f32 %v359, %v550
        %v562 = vmul.f32 %v360, %v550
        %v563 = vmul.f32 %v361, %v550
        %v564 = vmul.f32 %v362, %v550
        %v565 = vmul.f32 %v363, %v550
        %v566 = vmul.f32 %v364, %v550
        %v567 = vadd.f32 %v534, %v551
        %v568 = vadd.f32 %v535, %v552
        %v569 = vadd.f32 %v536, %v553
        %v570 = vadd.f32 %v537, %v554
        %v571 = vadd.f32 %v538, %v555
        %v572 = vadd.f32 %v539, %v556
        %v573 = vadd.f32 %v540, %v557
        %v574 = vadd.f32 %v541, %v558
        %v575 = vadd.f32 %v542, %v559
        %v576 = vadd.f32 %v543, %v560
        %v577 = vadd.f32 %v544, %v561
        %v578 = vadd.f32 %v545, %v562
        %v579 = vadd.f32 %v546, %v563
        %v580 = vadd.f32 %v547, %v564
        %v581 = vadd.f32 %v548, %v565
        %v582 = vadd.f32 %v549, %v566
        %v583 = vperm.slane %v530, 2
        %v584 = vmul.f32 %v490, %v583
        %v585 = vmul.f32 %v491, %v583
        %v586 = vmul.f32 %v492, %v583
        %v587 = vmul.f32 %v493, %v583
        %v588 = vmul.f32 %v494, %v583
        %v589 = vmul.f32 %v495, %v583
        %v590 = vmul.f32 %v496, %v583
        %v591 = vmul.f32 %v497, %v583
        %v592 = vmul.f32 %v498, %v583
        %v593 = vmul.f32 %v499, %v583
        %v594 = vmul.f32 %v500, %v583
        %v595 = vmul.f32 %v501, %v583
        %v596 = vmul.f32 %v502, %v583
        %v597 = vmul.f32 %v503, %v583
        %v598 = vmul.f32 %v504, %v583
        %v599 = vmul.f32 %v505, %v583
        %v600 = vadd.f32 %v567, %v584
        %v601 = vadd.f32 %v568, %v585
        %v602 = vadd.f32 %v569, %v586
        %v603 = vadd.f32 %v570, %v587
        %v604 = vadd.f32 %v571, %v588
        %v605 = vadd.f32 %v572, %v589
        %v606 = vadd.f32 %v573, %v590
        %v607 = vadd.f32 %v574, %v591
        %v608 = vadd.f32 %v575, %v592
        %v609 = vadd.f32 %v576, %v593
        %v610 = vadd.f32 %v577, %v594
        %v611 = vadd.f32 %v578, %v595
        %v612 = vadd.f32 %v579, %v596
        %v613 = vadd.f32 %v580, %v597
        %v614 = vadd.f32 %v581, %v598
        %v615 = vadd.f32 %v582, %v599
        %v616 = vperm.slane %v531, 0
        %v617 = vmul.f32 %v443, %v616
        %v618 = vmul.f32 %v444, %v616
        %v619 = vmul.f32 %v445, %v616
        %v620 = vmul.f32 %v446, %v616
        %v621 = vmul.f32 %v447, %v616
        %v622 = vmul.f32 %v448, %v616
        %v623 = vmul.f32 %v449, %v616
        %v624 = vmul.f32 %v450, %v616
        %v625 = vmul.f32 %v451, %v616
        %v626 = vmul.f32 %v452, %v616
        %v627 = vmul.f32 %v453, %v616
        %v628 = vmul.f32 %v454, %v616
        %v629 = vmul.f32 %v455, %v616
        %v630 = vmul.f32 %v456, %v616
        %v631 = vmul.f32 %v510, %v616
        %v632 = vmul.f32 %v511, %v616
        %v633 = vadd.f32 %v600, %v617
        %v634 = vadd.f32 %v601, %v618
        %v635 = vadd.f32 %v602, %v619
        %v636 = vadd.f32 %v603, %v620
        %v637 = vadd.f32 %v604, %v621
        %v638 = vadd.f32 %v605, %v622
        %v639 = vadd.f32 %v606, %v623
        %v640 = vadd.f32 %v607, %v624
        %v641 = vadd.f32 %v608, %v625
        %v642 = vadd.f32 %v609, %v626
        %v643 = vadd.f32 %v610, %v627
        %v644 = vadd.f32 %v611, %v628
        %v645 = vadd.f32 %v612, %v629
        %v646 = vadd.f32 %v613, %v630
        %v647 = vadd.f32 %v614, %v631
        %v648 = vadd.f32 %v615, %v632
        %v649 = vperm.slane %v531, 1
        %v650 = vmul.f32 %v351, %v649
        %v651 = vmul.f32 %v352, %v649
        %v652 = vmul.f32 %v353, %v649
        %v653 = vmul.f32 %v354, %v649
        %v654 = vmul.f32 %v355, %v649
        %v655 = vmul.f32 %v356, %v649
        %v656 = vmul.f32 %v357, %v649
        %v657 = vmul.f32 %v358, %v649
        %v658 = vmul.f32 %v359, %v649
        %v659 = vmul.f32 %v360, %v649
        %v660 = vmul.f32 %v361, %v649
        %v661 = vmul.f32 %v362, %v649
        %v662 = vmul.f32 %v363, %v649
        %v663 = vmul.f32 %v364, %v649
        %v664 = vmul.f32 %v365, %v649
        %v665 = vmul.f32 %v366, %v649
        %v666 = vadd.f32 %v633, %v650
        %v667 = vadd.f32 %v634, %v651
        %v668 = vadd.f32 %v635, %v652
        %v669 = vadd.f32 %v636, %v653
        %v670 = vadd.f32 %v637, %v654
        %v671 = vadd.f32 %v638, %v655
        %v672 = vadd.f32 %v639, %v656
        %v673 = vadd.f32 %v640, %v657
        %v674 = vadd.f32 %v641, %v658
        %v675 = vadd.f32 %v642, %v659
        %v676 = vadd.f32 %v643, %v660
        %v677 = vadd.f32 %v644, %v661
        %v678 = vadd.f32 %v645, %v662
        %v679 = vadd.f32 %v646, %v663
        %v680 = vadd.f32 %v647, %v664
        %v681 = vadd.f32 %v648, %v665
        %v682 = vperm.slane %v531, 2
        %v683 = vmul.f32 %v492, %v682
        %v684 = vmul.f32 %v493, %v682
        %v685 = vmul.f32 %v494, %v682
        %v686 = vmul.f32 %v495, %v682
        %v687 = vmul.f32 %v496, %v682
        %v688 = vmul.f32 %v497, %v682
        %v689 = vmul.f32 %v498, %v682
        %v690 = vmul.f32 %v499, %v682
        %v691 = vmul.f32 %v500, %v682
        %v692 = vmul.f32 %v501, %v682
        %v693 = vmul.f32 %v502, %v682
        %v694 = vmul.f32 %v503, %v682
        %v695 = vmul.f32 %v504, %v682
        %v696 = vmul.f32 %v505, %v682
        %v697 = vmul.f32 %v516, %v682
        %v698 = vmul.f32 %v517, %v682
        %v699 = vadd.f32 %v666, %v683
        %v700 = vadd.f32 %v667, %v684
        %v701 = vadd.f32 %v668, %v685
        %v702 = vadd.f32 %v669, %v686
        %v703 = vadd.f32 %v670, %v687
        %v704 = vadd.f32 %v671, %v688
        %v705 = vadd.f32 %v672, %v689
        %v706 = vadd.f32 %v673, %v690
        %v707 = vadd.f32 %v674, %v691
        %v708 = vadd.f32 %v675, %v692
        %v709 = vadd.f32 %v676, %v693
        %v710 = vadd.f32 %v677, %v694
        %v711 = vadd.f32 %v678, %v695
        %v712 = vadd.f32 %v679, %v696
        %v713 = vadd.f32 %v680, %v697
        %v714 = vadd.f32 %v681, %v698
        %v715 = vperm.slane %v532, 0
        %v716 = vmul.f32 %v445, %v715
        %v717 = vmul.f32 %v446, %v715
        %v718 = vmul.f32 %v447, %v715
        %v719 = vmul.f32 %v448, %v715
        %v720 = vmul.f32 %v449, %v715
        %v721 = vmul.f32 %v450, %v715
        %v722 = vmul.f32 %v451, %v715
        %v723 = vmul.f32 %v452, %v715
        %v724 = vmul.f32 %v453, %v715
        %v725 = vmul.f32 %v454, %v715
        %v726 = vmul.f32 %v455, %v715
        %v727 = vmul.f32 %v456, %v715
        %v728 = vmul.f32 %v510, %v715
        %v729 = vmul.f32 %v511, %v715
        %v730 = vmul.f32 %v522, %v715
        %v731 = vmul.f32 %v523, %v715
        %v732 = vadd.f32 %v699, %v716
        %v733 = vadd.f32 %v700, %v717
        %v734 = vadd.f32 %v701, %v718
        %v735 = vadd.f32 %v702, %v719
        %v736 = vadd.f32 %v703, %v720
        %v737 = vadd.f32 %v704, %v721
        %v738 = vadd.f32 %v705, %v722
        %v739 = vadd.f32 %v706, %v723
        %v740 = vadd.f32 %v707, %v724
        %v741 = vadd.f32 %v708, %v725
        %v742 = vadd.f32 %v709, %v726
        %v743 = vadd.f32 %v710, %v727
        %v744 = vadd.f32 %v711, %v728
        %v745 = vadd.f32 %v712, %v729
        %v746 = vadd.f32 %v713, %v730
        %v747 = vadd.f32 %v714, %v731
        %v748 = vperm.slane %v532, 1
        %v749 = vmul.f32 %v353, %v748
        %v750 = vmul.f32 %v354, %v748
        %v751 = vmul.f32 %v355, %v748
        %v752 = vmul.f32 %v356, %v748
        %v753 = vmul.f32 %v357, %v748
        %v754 = vmul.f32 %v358, %v748
        %v755 = vmul.f32 %v359, %v748
        %v756 = vmul.f32 %v360, %v748
        %v757 = vmul.f32 %v361, %v748
        %v758 = vmul.f32 %v362, %v748
        %v759 = vmul.f32 %v363, %v748
        %v760 = vmul.f32 %v364, %v748
        %v761 = vmul.f32 %v365, %v748
        %v762 = vmul.f32 %v366, %v748
        %v763 = vmul.f32 %v391, %v748
        %v764 = vmul.f32 %v392, %v748
        %v765 = vadd.f32 %v732, %v749
        %v766 = vadd.f32 %v733, %v750
        %v767 = vadd.f32 %v734, %v751
        %v768 = vadd.f32 %v735, %v752
        %v769 = vadd.f32 %v736, %v753
        %v770 = vadd.f32 %v737, %v754
        %v771 = vadd.f32 %v738, %v755
        %v772 = vadd.f32 %v739, %v756
        %v773 = vadd.f32 %v740, %v757
        %v774 = vadd.f32 %v741, %v758
        %v775 = vadd.f32 %v742, %v759
        %v776 = vadd.f32 %v743, %v760
        %v777 = vadd.f32 %v744, %v761
        %v778 = vadd.f32 %v745, %v762
        %v779 = vadd.f32 %v746, %v763
        %v780 = vadd.f32 %v747, %v764
        %v781 = vperm.slane %v532, 2
        %v782 = vmul.f32 %v494, %v781
        %v783 = vmul.f32 %v495, %v781
        %v784 = vmul.f32 %v496, %v781
        %v785 = vmul.f32 %v497, %v781
        %v786 = vmul.f32 %v498, %v781
        %v787 = vmul.f32 %v499, %v781
        %v788 = vmul.f32 %v500, %v781
        %v789 = vmul.f32 %v501, %v781
        %v790 = vmul.f32 %v502, %v781
        %v791 = vmul.f32 %v503, %v781
        %v792 = vmul.f32 %v504, %v781
        %v793 = vmul.f32 %v505, %v781
        %v794 = vmul.f32 %v516, %v781
        %v795 = vmul.f32 %v517, %v781
        %v796 = vmul.f32 %v528, %v781
        %v797 = vmul.f32 %v529, %v781
        %v798 = vadd.f32 %v765, %v782
        %v799 = vadd.f32 %v766, %v783
        %v800 = vadd.f32 %v767, %v784
        %v801 = vadd.f32 %v768, %v785
        %v802 = vadd.f32 %v769, %v786
        %v803 = vadd.f32 %v770, %v787
        %v804 = vadd.f32 %v771, %v788
        %v805 = vadd.f32 %v772, %v789
        %v806 = vadd.f32 %v773, %v790
        %v807 = vadd.f32 %v774, %v791
        %v808 = vadd.f32 %v775, %v792
        %v809 = vadd.f32 %v776, %v793
        %v810 = vadd.f32 %v777, %v794
        %v811 = vadd.f32 %v778, %v795
        %v812 = vadd.f32 %v779, %v796
        %v813 = vadd.f32 %v780, %v797
        %v814 = vld [vmem:[%s2] sm:$0xff]
        %v815 = vld [vmem:[%s2 + $0x8] sm:$0xff]
        %v816 = vld [vmem:[%s2 + $0x10] sm:$0xff]
        %v817 = vld [vmem:[%s2 + $0x18] sm:$0xff]
        %v818 = vld [vmem:[%s2 + $0x20] sm:$0xff]
        %v819 = vld [vmem:[%s2 + $0x28] sm:$0xff]
        %v820 = vld [vmem:[%s2 + $0x30] sm:$0xff]
        %v821 = vld [vmem:[%s2 + $0x38] sm:$0xff]
        %v822 = vld [vmem:[%s2 + $0x40] sm:$0xff]
        %v823 = vld [vmem:[%s2 + $0x48] sm:$0xff]
        %v824 = vld [vmem:[%s2 + $0x50] sm:$0xff]
        %v825 = vld [vmem:[%s2 + $0x58] sm:$0xff]
        %v826 = vld [vmem:[%s2 + $0x60] sm:$0xff]
        %v827 = vld [vmem:[%s2 + $0x68] sm:$0xff]
        %v828 = vld [vmem:[%s2 + $0x70] sm:$0xff]
        %v829 = vld [vmem:[%s2 + $0x78] sm:$0xff]
        %v830 = vld [vmem:[%s3] sm:$0x1]
        %v832 = vperm.slane %v830, 0
        %834 = vmatpush.msra.mxu0 %v829
        %835 = vmatpush.msra.mxu0 %v828
        %836 = vmatpush.msra.mxu0 %v827
        %837 = vmatpush.msra.mxu0 %v826
        %838 = vmatpush.msra.mxu0 %v825
        %839 = vmatpush.msra.mxu0 %v824
        %840 = vmatpush.msra.mxu0 %v823
        %841 = vmatpush.msra.mxu0 %v822
        %842 = vmatpush.msra.mxu0 %v821
        %843 = vmatpush.msra.mxu0 %v820
        %844 = vmatpush.msra.mxu0 %v819
        %845 = vmatpush.msra.mxu0 %v818
        %846 = vmatpush.msra.mxu0 %v817
        %847 = vmatpush.msra.mxu0 %v816
        %848 = vmatpush.msra.mxu0 %v815
        %849 = vmatpush.msra.mxu0 %v814
        %850 = vmatmul.f32.gmra.mxu0 %v798
        %v851 = vpop.f32.mrf.mxu0
        %v852 = vadd.f32 %v832, %v851
        %853 = vmatmul.f32.gmra.mxu0 %v799
        %v854 = vpop.f32.mrf.mxu0
        %v855 = vadd.f32 %v832, %v854
        %856 = vmatmul.f32.gmra.mxu0 %v800
        %v857 = vpop.f32.mrf.mxu0
        %v858 = vadd.f32 %v832, %v857
        %859 = vmatmul.f32.gmra.mxu0 %v801
        %v860 = vpop.f32.mrf.mxu0
        %v861 = vadd.f32 %v832, %v860
        %862 = vmatmul.f32.gmra.mxu0 %v802
        %v863 = vpop.f32.mrf.mxu0
        %v864 = vadd.f32 %v832, %v863
        %865 = vmatmul.f32.gmra.mxu0 %v803
        %v866 = vpop.f32.mrf.mxu0
        %v867 = vadd.f32 %v832, %v866
        %868 = vmatmul.f32.gmra.mxu0 %v804
        %v869 = vpop.f32.mrf.mxu0
        %v870 = vadd.f32 %v832, %v869
        %871 = vmatmul.f32.gmra.mxu0 %v805
        %v872 = vpop.f32.mrf.mxu0
        %v873 = vadd.f32 %v832, %v872
        %874 = vmatmul.f32.gmra.mxu0 %v806
        %v875 = vpop.f32.mrf.mxu0
        %v876 = vadd.f32 %v832, %v875
        %877 = vmatmul.f32.gmra.mxu0 %v807
        %v878 = vpop.f32.mrf.mxu0
        %v879 = vadd.f32 %v832, %v878
        %880 = vmatmul.f32.gmra.mxu0 %v808
        %v881 = vpop.f32.mrf.mxu0
        %v882 = vadd.f32 %v832, %v881
        %883 = vmatmul.f32.gmra.mxu0 %v809
        %v884 = vpop.f32.mrf.mxu0
        %v885 = vadd.f32 %v832, %v884
        %886 = vmatmul.f32.gmra.mxu0 %v810
        %v887 = vpop.f32.mrf.mxu0
        %v888 = vadd.f32 %v832, %v887
        %889 = vmatmul.f32.gmra.mxu0 %v811
        %v890 = vpop.f32.mrf.mxu0
        %v891 = vadd.f32 %v832, %v890
        %892 = vmatmul.f32.gmra.mxu0 %v812
        %v893 = vpop.f32.mrf.mxu0
        %v894 = vadd.f32 %v832, %v893
        %895 = vmatmul.f32.gmra.mxu0 %v813
        %v896 = vpop.f32.mrf.mxu0
        %v897 = vadd.f32 %v832, %v896
        %898 = vdwg.mxu0
        %v899 = vxor.u32 %v852, 2147483648
        %v900 = vxor.u32 %v855, 2147483648
        %v901 = vxor.u32 %v858, 2147483648
        %v902 = vxor.u32 %v861, 2147483648
        %v903 = vxor.u32 %v864, 2147483648
        %v904 = vxor.u32 %v867, 2147483648
        %v905 = vxor.u32 %v870, 2147483648
        %v906 = vxor.u32 %v873, 2147483648
        %v907 = vxor.u32 %v876, 2147483648
        %v908 = vxor.u32 %v879, 2147483648
        %v909 = vxor.u32 %v882, 2147483648
        %v910 = vxor.u32 %v885, 2147483648
        %v911 = vxor.u32 %v888, 2147483648
        %v912 = vxor.u32 %v891, 2147483648
        %v913 = vxor.u32 %v894, 2147483648
        %v914 = vxor.u32 %v897, 2147483648
        %v915 = vmul.f32 %v899, 1.442695
        %v916 = vpow.pop %v915
        %v917 = vmul.f32 %v900, 1.442695
        %v918 = vpow.pop %v917
        %v919 = vmul.f32 %v901, 1.442695
        %v920 = vpow.pop %v919
        %v921 = vmul.f32 %v902, 1.442695
        %v922 = vpow.pop %v921
        %v923 = vmul.f32 %v903, 1.442695
        %v924 = vpow.pop %v923
        %v925 = vmul.f32 %v904, 1.442695
        %v926 = vpow.pop %v925
        %v927 = vmul.f32 %v905, 1.442695
        %v928 = vpow.pop %v927
        %v929 = vmul.f32 %v906, 1.442695
        %v930 = vpow.pop %v929
        %v931 = vmul.f32 %v907, 1.442695
        %v932 = vpow.pop %v931
        %v933 = vmul.f32 %v908, 1.442695
        %v934 = vpow.pop %v933
        %v935 = vmul.f32 %v909, 1.442695
        %v936 = vpow.pop %v935
        %v937 = vmul.f32 %v910, 1.442695
        %v938 = vpow.pop %v937
        %v939 = vmul.f32 %v911, 1.442695
        %v940 = vpow.pop %v939
        %v941 = vmul.f32 %v912, 1.442695
        %v942 = vpow.pop %v941
        %v943 = vmul.f32 %v913, 1.442695
        %v944 = vpow.pop %v943
        %v945 = vmul.f32 %v914, 1.442695
        %v946 = vpow.pop %v945
        %v947 = vadd.f32 %v916, 1.0
        %v948 = vadd.f32 %v918, 1.0
        %v949 = vadd.f32 %v920, 1.0
        %v950 = vadd.f32 %v922, 1.0
        %v951 = vadd.f32 %v924, 1.0
        %v952 = vadd.f32 %v926, 1.0
        %v953 = vadd.f32 %v928, 1.0
        %v954 = vadd.f32 %v930, 1.0
        %v955 = vadd.f32 %v932, 1.0
        %v956 = vadd.f32 %v934, 1.0
        %v957 = vadd.f32 %v936, 1.0
        %v958 = vadd.f32 %v938, 1.0
        %v959 = vadd.f32 %v940, 1.0
        %v960 = vadd.f32 %v942, 1.0
        %v961 = vadd.f32 %v944, 1.0
        %v962 = vadd.f32 %v946, 1.0
        %v963 = vrcp.pop %v947
        %v964 = vmul.f32 %v947, %v963
        %v965 = vsub.f32 1.0, %v964
        %v966 = vmul.f32 %v963, %v965
        %v967 = vadd.f32 %v963, %v966
        %vm968 = vweird.f32 %v947
        %vm969 = vweird.f32 %v963
        %vm970 = vmor %vm968, %vm969
        %v971 = vsel %vm970, %v963, %v967
        %v972 = vand.u32 2147483647, %v947
        %vm973 = vcmp.eq.f32.partialorder %v972, 8.507059e+37
        %v974 = vand.u32 %v947, 2147483648
        %v975 = vor.u32 1.1754944e-38, %v974
        %v976 = vsel %vm973, %v975, %v971
        %v977 = vmul.f32 1.0, %v976
        %v978 = vrcp.pop %v948
        %v979 = vmul.f32 %v948, %v978
        %v980 = vsub.f32 1.0, %v979
        %v981 = vmul.f32 %v978, %v980
        %v982 = vadd.f32 %v978, %v981
        %vm983 = vweird.f32 %v948
        %vm984 = vweird.f32 %v978
        %vm985 = vmor %vm983, %vm984
        %v986 = vsel %vm985, %v978, %v982
        %v987 = vand.u32 2147483647, %v948
        %vm988 = vcmp.eq.f32.partialorder %v987, 8.507059e+37
        %v989 = vand.u32 %v948, 2147483648
        %v990 = vor.u32 1.1754944e-38, %v989
        %v991 = vsel %vm988, %v990, %v986
        %v992 = vmul.f32 1.0, %v991
        %v993 = vrcp.pop %v949
        %v994 = vmul.f32 %v949, %v993
        %v995 = vsub.f32 1.0, %v994
        %v996 = vmul.f32 %v993, %v995
        %v997 = vadd.f32 %v993, %v996
        %vm998 = vweird.f32 %v949
        %vm999 = vweird.f32 %v993
        %vm1000 = vmor %vm998, %vm999
        %v1001 = vsel %vm1000, %v993, %v997
        %v1002 = vand.u32 2147483647, %v949
        %vm1003 = vcmp.eq.f32.partialorder %v1002, 8.507059e+37
        %v1004 = vand.u32 %v949, 2147483648
        %v1005 = vor.u32 1.1754944e-38, %v1004
        %v1006 = vsel %vm1003, %v1005, %v1001
        %v1007 = vmul.f32 1.0, %v1006
        %v1008 = vrcp.pop %v950
        %v1009 = vmul.f32 %v950, %v1008
        %v1010 = vsub.f32 1.0, %v1009
        %v1011 = vmul.f32 %v1008, %v1010
        %v1012 = vadd.f32 %v1008, %v1011
        %vm1013 = vweird.f32 %v950
        %vm1014 = vweird.f32 %v1008
        %vm1015 = vmor %vm1013, %vm1014
        %v1016 = vsel %vm1015, %v1008, %v1012
        %v1017 = vand.u32 2147483647, %v950
        %vm1018 = vcmp.eq.f32.partialorder %v1017, 8.507059e+37
        %v1019 = vand.u32 %v950, 2147483648
        %v1020 = vor.u32 1.1754944e-38, %v1019
        %v1021 = vsel %vm1018, %v1020, %v1016
        %v1022 = vmul.f32 1.0, %v1021
        %v1023 = vrcp.pop %v951
        %v1024 = vmul.f32 %v951, %v1023
        %v1025 = vsub.f32 1.0, %v1024
        %v1026 = vmul.f32 %v1023, %v1025
        %v1027 = vadd.f32 %v1023, %v1026
        %vm1028 = vweird.f32 %v951
        %vm1029 = vweird.f32 %v1023
        %vm1030 = vmor %vm1028, %vm1029
        %v1031 = vsel %vm1030, %v1023, %v1027
        %v1032 = vand.u32 2147483647, %v951
        %vm1033 = vcmp.eq.f32.partialorder %v1032, 8.507059e+37
        %v1034 = vand.u32 %v951, 2147483648
        %v1035 = vor.u32 1.1754944e-38, %v1034
        %v1036 = vsel %vm1033, %v1035, %v1031
        %v1037 = vmul.f32 1.0, %v1036
        %v1038 = vrcp.pop %v952
        %v1039 = vmul.f32 %v952, %v1038
        %v1040 = vsub.f32 1.0, %v1039
        %v1041 = vmul.f32 %v1038, %v1040
        %v1042 = vadd.f32 %v1038, %v1041
        %vm1043 = vweird.f32 %v952
        %vm1044 = vweird.f32 %v1038
        %vm1045 = vmor %vm1043, %vm1044
        %v1046 = vsel %vm1045, %v1038, %v1042
        %v1047 = vand.u32 2147483647, %v952
        %vm1048 = vcmp.eq.f32.partialorder %v1047, 8.507059e+37
        %v1049 = vand.u32 %v952, 2147483648
        %v1050 = vor.u32 1.1754944e-38, %v1049
        %v1051 = vsel %vm1048, %v1050, %v1046
        %v1052 = vmul.f32 1.0, %v1051
        %v1053 = vrcp.pop %v953
        %v1054 = vmul.f32 %v953, %v1053
        %v1055 = vsub.f32 1.0, %v1054
        %v1056 = vmul.f32 %v1053, %v1055
        %v1057 = vadd.f32 %v1053, %v1056
        %vm1058 = vweird.f32 %v953
        %vm1059 = vweird.f32 %v1053
        %vm1060 = vmor %vm1058, %vm1059
        %v1061 = vsel %vm1060, %v1053, %v1057
        %v1062 = vand.u32 2147483647, %v953
        %vm1063 = vcmp.eq.f32.partialorder %v1062, 8.507059e+37
        %v1064 = vand.u32 %v953, 2147483648
        %v1065 = vor.u32 1.1754944e-38, %v1064
        %v1066 = vsel %vm1063, %v1065, %v1061
        %v1067 = vmul.f32 1.0, %v1066
        %v1068 = vrcp.pop %v954
        %v1069 = vmul.f32 %v954, %v1068
        %v1070 = vsub.f32 1.0, %v1069
        %v1071 = vmul.f32 %v1068, %v1070
        %v1072 = vadd.f32 %v1068, %v1071
        %vm1073 = vweird.f32 %v954
        %vm1074 = vweird.f32 %v1068
        %vm1075 = vmor %vm1073, %vm1074
        %v1076 = vsel %vm1075, %v1068, %v1072
        %v1077 = vand.u32 2147483647, %v954
        %vm1078 = vcmp.eq.f32.partialorder %v1077, 8.507059e+37
        %v1079 = vand.u32 %v954, 2147483648
        %v1080 = vor.u32 1.1754944e-38, %v1079
        %v1081 = vsel %vm1078, %v1080, %v1076
        %v1082 = vmul.f32 1.0, %v1081
        %v1083 = vrcp.pop %v955
        %v1084 = vmul.f32 %v955, %v1083
        %v1085 = vsub.f32 1.0, %v1084
        %v1086 = vmul.f32 %v1083, %v1085
        %v1087 = vadd.f32 %v1083, %v1086
        %vm1088 = vweird.f32 %v955
        %vm1089 = vweird.f32 %v1083
        %vm1090 = vmor %vm1088, %vm1089
        %v1091 = vsel %vm1090, %v1083, %v1087
        %v1092 = vand.u32 2147483647, %v955
        %vm1093 = vcmp.eq.f32.partialorder %v1092, 8.507059e+37
        %v1094 = vand.u32 %v955, 2147483648
        %v1095 = vor.u32 1.1754944e-38, %v1094
        %v1096 = vsel %vm1093, %v1095, %v1091
        %v1097 = vmul.f32 1.0, %v1096
        %v1098 = vrcp.pop %v956
        %v1099 = vmul.f32 %v956, %v1098
        %v1100 = vsub.f32 1.0, %v1099
        %v1101 = vmul.f32 %v1098, %v1100
        %v1102 = vadd.f32 %v1098, %v1101
        %vm1103 = vweird.f32 %v956
        %vm1104 = vweird.f32 %v1098
        %vm1105 = vmor %vm1103, %vm1104
        %v1106 = vsel %vm1105, %v1098, %v1102
        %v1107 = vand.u32 2147483647, %v956
        %vm1108 = vcmp.eq.f32.partialorder %v1107, 8.507059e+37
        %v1109 = vand.u32 %v956, 2147483648
        %v1110 = vor.u32 1.1754944e-38, %v1109
        %v1111 = vsel %vm1108, %v1110, %v1106
        %v1112 = vmul.f32 1.0, %v1111
        %v1113 = vrcp.pop %v957
        %v1114 = vmul.f32 %v957, %v1113
        %v1115 = vsub.f32 1.0, %v1114
        %v1116 = vmul.f32 %v1113, %v1115
        %v1117 = vadd.f32 %v1113, %v1116
        %vm1118 = vweird.f32 %v957
        %vm1119 = vweird.f32 %v1113
        %vm1120 = vmor %vm1118, %vm1119
        %v1121 = vsel %vm1120, %v1113, %v1117
        %v1122 = vand.u32 2147483647, %v957
        %vm1123 = vcmp.eq.f32.partialorder %v1122, 8.507059e+37
        %v1124 = vand.u32 %v957, 2147483648
        %v1125 = vor.u32 1.1754944e-38, %v1124
        %v1126 = vsel %vm1123, %v1125, %v1121
        %v1127 = vmul.f32 1.0, %v1126
        %v1128 = vrcp.pop %v958
        %v1129 = vmul.f32 %v958, %v1128
        %v1130 = vsub.f32 1.0, %v1129
        %v1131 = vmul.f32 %v1128, %v1130
        %v1132 = vadd.f32 %v1128, %v1131
        %vm1133 = vweird.f32 %v958
        %vm1134 = vweird.f32 %v1128
        %vm1135 = vmor %vm1133, %vm1134
        %v1136 = vsel %vm1135, %v1128, %v1132
        %v1137 = vand.u32 2147483647, %v958
        %vm1138 = vcmp.eq.f32.partialorder %v1137, 8.507059e+37
        %v1139 = vand.u32 %v958, 2147483648
        %v1140 = vor.u32 1.1754944e-38, %v1139
        %v1141 = vsel %vm1138, %v1140, %v1136
        %v1142 = vmul.f32 1.0, %v1141
        %v1143 = vrcp.pop %v959
        %v1144 = vmul.f32 %v959, %v1143
        %v1145 = vsub.f32 1.0, %v1144
        %v1146 = vmul.f32 %v1143, %v1145
        %v1147 = vadd.f32 %v1143, %v1146
        %vm1148 = vweird.f32 %v959
        %vm1149 = vweird.f32 %v1143
        %vm1150 = vmor %vm1148, %vm1149
        %v1151 = vsel %vm1150, %v1143, %v1147
        %v1152 = vand.u32 2147483647, %v959
        %vm1153 = vcmp.eq.f32.partialorder %v1152, 8.507059e+37
        %v1154 = vand.u32 %v959, 2147483648
        %v1155 = vor.u32 1.1754944e-38, %v1154
        %v1156 = vsel %vm1153, %v1155, %v1151
        %v1157 = vmul.f32 1.0, %v1156
        %v1158 = vrcp.pop %v960
        %v1159 = vmul.f32 %v960, %v1158
        %v1160 = vsub.f32 1.0, %v1159
        %v1161 = vmul.f32 %v1158, %v1160
        %v1162 = vadd.f32 %v1158, %v1161
        %vm1163 = vweird.f32 %v960
        %vm1164 = vweird.f32 %v1158
        %vm1165 = vmor %vm1163, %vm1164
        %v1166 = vsel %vm1165, %v1158, %v1162
        %v1167 = vand.u32 2147483647, %v960
        %vm1168 = vcmp.eq.f32.partialorder %v1167, 8.507059e+37
        %v1169 = vand.u32 %v960, 2147483648
        %v1170 = vor.u32 1.1754944e-38, %v1169
        %v1171 = vsel %vm1168, %v1170, %v1166
        %v1172 = vmul.f32 1.0, %v1171
        %v1173 = vrcp.pop %v961
        %v1174 = vmul.f32 %v961, %v1173
        %v1175 = vsub.f32 1.0, %v1174
        %v1176 = vmul.f32 %v1173, %v1175
        %v1177 = vadd.f32 %v1173, %v1176
        %vm1178 = vweird.f32 %v961
        %vm1179 = vweird.f32 %v1173
        %vm1180 = vmor %vm1178, %vm1179
        %v1181 = vsel %vm1180, %v1173, %v1177
        %v1182 = vand.u32 2147483647, %v961
        %vm1183 = vcmp.eq.f32.partialorder %v1182, 8.507059e+37
        %v1184 = vand.u32 %v961, 2147483648
        %v1185 = vor.u32 1.1754944e-38, %v1184
        %v1186 = vsel %vm1183, %v1185, %v1181
        %v1187 = vmul.f32 1.0, %v1186
        %v1188 = vrcp.pop %v962
        %v1189 = vmul.f32 %v962, %v1188
        %v1190 = vsub.f32 1.0, %v1189
        %v1191 = vmul.f32 %v1188, %v1190
        %v1192 = vadd.f32 %v1188, %v1191
        %vm1193 = vweird.f32 %v962
        %vm1194 = vweird.f32 %v1188
        %vm1195 = vmor %vm1193, %vm1194
        %v1196 = vsel %vm1195, %v1188, %v1192
        %v1197 = vand.u32 2147483647, %v962
        %vm1198 = vcmp.eq.f32.partialorder %v1197, 8.507059e+37
        %v1199 = vand.u32 %v962, 2147483648
        %v1200 = vor.u32 1.1754944e-38, %v1199
        %v1201 = vsel %vm1198, %v1200, %v1196
        %v1202 = vmul.f32 1.0, %v1201
        %vm1203 = vcmask 31744
        %1204 = vst.msk [vmem:[%s336] sm:$0xff] %vm1203, %v977
        %1205 = vst.msk [vmem:[%s336 + $0x8] sm:$0xff] %vm1203, %v992
        %1206 = vst.msk [vmem:[%s336 + $0x10] sm:$0xff] %vm1203, %v1007
        %1207 = vst.msk [vmem:[%s336 + $0x18] sm:$0xff] %vm1203, %v1022
        %1208 = vst.msk [vmem:[%s336 + $0x20] sm:$0xff] %vm1203, %v1037
        %1209 = vst.msk [vmem:[%s336 + $0x28] sm:$0xff] %vm1203, %v1052
        %1210 = vst.msk [vmem:[%s336 + $0x30] sm:$0xff] %vm1203, %v1067
        %1211 = vst.msk [vmem:[%s336 + $0x38] sm:$0xff] %vm1203, %v1082
        %1212 = vst.msk [vmem:[%s336 + $0x40] sm:$0xff] %vm1203, %v1097
        %1213 = vst.msk [vmem:[%s336 + $0x48] sm:$0xff] %vm1203, %v1112
        %1214 = vst.msk [vmem:[%s336 + $0x50] sm:$0xff] %vm1203, %v1127
        %1215 = vst.msk [vmem:[%s336 + $0x58] sm:$0xff] %vm1203, %v1142
        %1216 = vst.msk [vmem:[%s336 + $0x60] sm:$0xff] %vm1203, %v1157
        %1217 = vst.msk [vmem:[%s336 + $0x68] sm:$0xff] %vm1203, %v1172
        %1218 = vst.msk [vmem:[%s336 + $0x70] sm:$0xff] %vm1203, %v1187
        %1219 = vst.msk [vmem:[%s336 + $0x78] sm:$0xff] %vm1203, %v1202
        %s1220 = scalar_lea.vmem %s1, 12
        %v1221 = vld [vmem:[%s1220] sm:$0x7]
        %v1222 = vld [vmem:[%s1220 + $0x4] sm:$0x7]
        %v1223 = vld [vmem:[%s1220 + $0x8] sm:$0x7]
        %v1224 = vperm.slane %v1221, 0
        %v1225 = vmul.f32 %v441, %v1224
        %v1226 = vmul.f32 %v442, %v1224
        %v1227 = vmul.f32 %v443, %v1224
        %v1228 = vmul.f32 %v444, %v1224
        %v1229 = vmul.f32 %v445, %v1224
        %v1230 = vmul.f32 %v446, %v1224
        %v1231 = vmul.f32 %v447, %v1224
        %v1232 = vmul.f32 %v448, %v1224
        %v1233 = vmul.f32 %v449, %v1224
        %v1234 = vmul.f32 %v450, %v1224
        %v1235 = vmul.f32 %v451, %v1224
        %v1236 = vmul.f32 %v452, %v1224
        %v1237 = vmul.f32 %v453, %v1224
        %v1238 = vmul.f32 %v454, %v1224
        %v1239 = vmul.f32 %v455, %v1224
        %v1240 = vmul.f32 %v456, %v1224
        %v1241 = vperm.slane %v1221, 1
        %v1242 = vmul.f32 %v381, %v1241
        %v1243 = vmul.f32 %v382, %v1241
        %v1244 = vmul.f32 %v351, %v1241
        %v1245 = vmul.f32 %v352, %v1241
        %v1246 = vmul.f32 %v353, %v1241
        %v1247 = vmul.f32 %v354, %v1241
        %v1248 = vmul.f32 %v355, %v1241
        %v1249 = vmul.f32 %v356, %v1241
        %v1250 = vmul.f32 %v357, %v1241
        %v1251 = vmul.f32 %v358, %v1241
        %v1252 = vmul.f32 %v359, %v1241
        %v1253 = vmul.f32 %v360, %v1241
        %v1254 = vmul.f32 %v361, %v1241
        %v1255 = vmul.f32 %v362, %v1241
        %v1256 = vmul.f32 %v363, %v1241
        %v1257 = vmul.f32 %v364, %v1241
        %v1258 = vadd.f32 %v1225, %v1242
        %v1259 = vadd.f32 %v1226, %v1243
        %v1260 = vadd.f32 %v1227, %v1244
        %v1261 = vadd.f32 %v1228, %v1245
        %v1262 = vadd.f32 %v1229, %v1246
        %v1263 = vadd.f32 %v1230, %v1247
        %v1264 = vadd.f32 %v1231, %v1248
        %v1265 = vadd.f32 %v1232, %v1249
        %v1266 = vadd.f32 %v1233, %v1250
        %v1267 = vadd.f32 %v1234, %v1251
        %v1268 = vadd.f32 %v1235, %v1252
        %v1269 = vadd.f32 %v1236, %v1253
        %v1270 = vadd.f32 %v1237, %v1254
        %v1271 = vadd.f32 %v1238, %v1255
        %v1272 = vadd.f32 %v1239, %v1256
        %v1273 = vadd.f32 %v1240, %v1257
        %v1274 = vperm.slane %v1221, 2
        %v1275 = vmul.f32 %v490, %v1274
        %v1276 = vmul.f32 %v491, %v1274
        %v1277 = vmul.f32 %v492, %v1274
        %v1278 = vmul.f32 %v493, %v1274
        %v1279 = vmul.f32 %v494, %v1274
        %v1280 = vmul.f32 %v495, %v1274
        %v1281 = vmul.f32 %v496, %v1274
        %v1282 = vmul.f32 %v497, %v1274
        %v1283 = vmul.f32 %v498, %v1274
        %v1284 = vmul.f32 %v499, %v1274
        %v1285 = vmul.f32 %v500, %v1274
        %v1286 = vmul.f32 %v501, %v1274
        %v1287 = vmul.f32 %v502, %v1274
        %v1288 = vmul.f32 %v503, %v1274
        %v1289 = vmul.f32 %v504, %v1274
        %v1290 = vmul.f32 %v505, %v1274
        %v1291 = vadd.f32 %v1258, %v1275
        %v1292 = vadd.f32 %v1259, %v1276
        %v1293 = vadd.f32 %v1260, %v1277
        %v1294 = vadd.f32 %v1261, %v1278
        %v1295 = vadd.f32 %v1262, %v1279
        %v1296 = vadd.f32 %v1263, %v1280
        %v1297 = vadd.f32 %v1264, %v1281
        %v1298 = vadd.f32 %v1265, %v1282
        %v1299 = vadd.f32 %v1266, %v1283
        %v1300 = vadd.f32 %v1267, %v1284
        %v1301 = vadd.f32 %v1268, %v1285
        %v1302 = vadd.f32 %v1269, %v1286
        %v1303 = vadd.f32 %v1270, %v1287
        %v1304 = vadd.f32 %v1271, %v1288
        %v1305 = vadd.f32 %v1272, %v1289
        %v1306 = vadd.f32 %v1273, %v1290
        %v1307 = vperm.slane %v1222, 0
        %v1308 = vmul.f32 %v443, %v1307
        %v1309 = vmul.f32 %v444, %v1307
        %v1310 = vmul.f32 %v445, %v1307
        %v1311 = vmul.f32 %v446, %v1307
        %v1312 = vmul.f32 %v447, %v1307
        %v1313 = vmul.f32 %v448, %v1307
        %v1314 = vmul.f32 %v449, %v1307
        %v1315 = vmul.f32 %v450, %v1307
        %v1316 = vmul.f32 %v451, %v1307
        %v1317 = vmul.f32 %v452, %v1307
        %v1318 = vmul.f32 %v453, %v1307
        %v1319 = vmul.f32 %v454, %v1307
        %v1320 = vmul.f32 %v455, %v1307
        %v1321 = vmul.f32 %v456, %v1307
        %v1322 = vmul.f32 %v510, %v1307
        %v1323 = vmul.f32 %v511, %v1307
        %v1324 = vadd.f32 %v1291, %v1308
        %v1325 = vadd.f32 %v1292, %v1309
        %v1326 = vadd.f32 %v1293, %v1310
        %v1327 = vadd.f32 %v1294, %v1311
        %v1328 = vadd.f32 %v1295, %v1312
        %v1329 = vadd.f32 %v1296, %v1313
        %v1330 = vadd.f32 %v1297, %v1314
        %v1331 = vadd.f32 %v1298, %v1315
        %v1332 = vadd.f32 %v1299, %v1316
        %v1333 = vadd.f32 %v1300, %v1317
        %v1334 = vadd.f32 %v1301, %v1318
        %v1335 = vadd.f32 %v1302, %v1319
        %v1336 = vadd.f32 %v1303, %v1320
        %v1337 = vadd.f32 %v1304, %v1321
        %v1338 = vadd.f32 %v1305, %v1322
        %v1339 = vadd.f32 %v1306, %v1323
        %v1340 = vperm.slane %v1222, 1
        %v1341 = vmul.f32 %v351, %v1340
        %v1342 = vmul.f32 %v352, %v1340
        %v1343 = vmul.f32 %v353, %v1340
        %v1344 = vmul.f32 %v354, %v1340
        %v1345 = vmul.f32 %v355, %v1340
        %v1346 = vmul.f32 %v356, %v1340
        %v1347 = vmul.f32 %v357, %v1340
        %v1348 = vmul.f32 %v358, %v1340
        %v1349 = vmul.f32 %v359, %v1340
        %v1350 = vmul.f32 %v360, %v1340
        %v1351 = vmul.f32 %v361, %v1340
        %v1352 = vmul.f32 %v362, %v1340
        %v1353 = vmul.f32 %v363, %v1340
        %v1354 = vmul.f32 %v364, %v1340
        %v1355 = vmul.f32 %v365, %v1340
        %v1356 = vmul.f32 %v366, %v1340
        %v1357 = vadd.f32 %v1324, %v1341
        %v1358 = vadd.f32 %v1325, %v1342
        %v1359 = vadd.f32 %v1326, %v1343
        %v1360 = vadd.f32 %v1327, %v1344
        %v1361 = vadd.f32 %v1328, %v1345
        %v1362 = vadd.f32 %v1329, %v1346
        %v1363 = vadd.f32 %v1330, %v1347
        %v1364 = vadd.f32 %v1331, %v1348
        %v1365 = vadd.f32 %v1332, %v1349
        %v1366 = vadd.f32 %v1333, %v1350
        %v1367 = vadd.f32 %v1334, %v1351
        %v1368 = vadd.f32 %v1335, %v1352
        %v1369 = vadd.f32 %v1336, %v1353
        %v1370 = vadd.f32 %v1337, %v1354
        %v1371 = vadd.f32 %v1338, %v1355
        %v1372 = vadd.f32 %v1339, %v1356
        %v1373 = vperm.slane %v1222, 2
        %v1374 = vmul.f32 %v492, %v1373
        %v1375 = vmul.f32 %v493, %v1373
        %v1376 = vmul.f32 %v494, %v1373
        %v1377 = vmul.f32 %v495, %v1373
        %v1378 = vmul.f32 %v496, %v1373
        %v1379 = vmul.f32 %v497, %v1373
        %v1380 = vmul.f32 %v498, %v1373
        %v1381 = vmul.f32 %v499, %v1373
        %v1382 = vmul.f32 %v500, %v1373
        %v1383 = vmul.f32 %v501, %v1373
        %v1384 = vmul.f32 %v502, %v1373
        %v1385 = vmul.f32 %v503, %v1373
        %v1386 = vmul.f32 %v504, %v1373
        %v1387 = vmul.f32 %v505, %v1373
        %v1388 = vmul.f32 %v516, %v1373
        %v1389 = vmul.f32 %v517, %v1373
        %v1390 = vadd.f32 %v1357, %v1374
        %v1391 = vadd.f32 %v1358, %v1375
        %v1392 = vadd.f32 %v1359, %v1376
        %v1393 = vadd.f32 %v1360, %v1377
        %v1394 = vadd.f32 %v1361, %v1378
        %v1395 = vadd.f32 %v1362, %v1379
        %v1396 = vadd.f32 %v1363, %v1380
        %v1397 = vadd.f32 %v1364, %v1381
        %v1398 = vadd.f32 %v1365, %v1382
        %v1399 = vadd.f32 %v1366, %v1383
        %v1400 = vadd.f32 %v1367, %v1384
        %v1401 = vadd.f32 %v1368, %v1385
        %v1402 = vadd.f32 %v1369, %v1386
        %v1403 = vadd.f32 %v1370, %v1387
        %v1404 = vadd.f32 %v1371, %v1388
        %v1405 = vadd.f32 %v1372, %v1389
        %v1406 = vperm.slane %v1223, 0
        %v1407 = vmul.f32 %v445, %v1406
        %v1408 = vmul.f32 %v446, %v1406
        %v1409 = vmul.f32 %v447, %v1406
        %v1410 = vmul.f32 %v448, %v1406
        %v1411 = vmul.f32 %v449, %v1406
        %v1412 = vmul.f32 %v450, %v1406
        %v1413 = vmul.f32 %v451, %v1406
        %v1414 = vmul.f32 %v452, %v1406
        %v1415 = vmul.f32 %v453, %v1406
        %v1416 = vmul.f32 %v454, %v1406
        %v1417 = vmul.f32 %v455, %v1406
        %v1418 = vmul.f32 %v456, %v1406
        %v1419 = vmul.f32 %v510, %v1406
        %v1420 = vmul.f32 %v511, %v1406
        %v1421 = vmul.f32 %v522, %v1406
        %v1422 = vmul.f32 %v523, %v1406
        %v1423 = vadd.f32 %v1390, %v1407
        %v1424 = vadd.f32 %v1391, %v1408
        %v1425 = vadd.f32 %v1392, %v1409
        %v1426 = vadd.f32 %v1393, %v1410
        %v1427 = vadd.f32 %v1394, %v1411
        %v1428 = vadd.f32 %v1395, %v1412
        %v1429 = vadd.f32 %v1396, %v1413
        %v1430 = vadd.f32 %v1397, %v1414
        %v1431 = vadd.f32 %v1398, %v1415
        %v1432 = vadd.f32 %v1399, %v1416
        %v1433 = vadd.f32 %v1400, %v1417
        %v1434 = vadd.f32 %v1401, %v1418
        %v1435 = vadd.f32 %v1402, %v1419
        %v1436 = vadd.f32 %v1403, %v1420
        %v1437 = vadd.f32 %v1404, %v1421
        %v1438 = vadd.f32 %v1405, %v1422
        %v1439 = vperm.slane %v1223, 1
        %v1440 = vmul.f32 %v353, %v1439
        %v1441 = vmul.f32 %v354, %v1439
        %v1442 = vmul.f32 %v355, %v1439
        %v1443 = vmul.f32 %v356, %v1439
        %v1444 = vmul.f32 %v357, %v1439
        %v1445 = vmul.f32 %v358, %v1439
        %v1446 = vmul.f32 %v359, %v1439
        %v1447 = vmul.f32 %v360, %v1439
        %v1448 = vmul.f32 %v361, %v1439
        %v1449 = vmul.f32 %v362, %v1439
        %v1450 = vmul.f32 %v363, %v1439
        %v1451 = vmul.f32 %v364, %v1439
        %v1452 = vmul.f32 %v365, %v1439
        %v1453 = vmul.f32 %v366, %v1439
        %v1454 = vmul.f32 %v391, %v1439
        %v1455 = vmul.f32 %v392, %v1439
        %v1456 = vadd.f32 %v1423, %v1440
        %v1457 = vadd.f32 %v1424, %v1441
        %v1458 = vadd.f32 %v1425, %v1442
        %v1459 = vadd.f32 %v1426, %v1443
        %v1460 = vadd.f32 %v1427, %v1444
        %v1461 = vadd.f32 %v1428, %v1445
        %v1462 = vadd.f32 %v1429, %v1446
        %v1463 = vadd.f32 %v1430, %v1447
        %v1464 = vadd.f32 %v1431, %v1448
        %v1465 = vadd.f32 %v1432, %v1449
        %v1466 = vadd.f32 %v1433, %v1450
        %v1467 = vadd.f32 %v1434, %v1451
        %v1468 = vadd.f32 %v1435, %v1452
        %v1469 = vadd.f32 %v1436, %v1453
        %v1470 = vadd.f32 %v1437, %v1454
        %v1471 = vadd.f32 %v1438, %v1455
        %v1472 = vperm.slane %v1223, 2
        %v1473 = vmul.f32 %v494, %v1472
        %v1474 = vmul.f32 %v495, %v1472
        %v1475 = vmul.f32 %v496, %v1472
        %v1476 = vmul.f32 %v497, %v1472
        %v1477 = vmul.f32 %v498, %v1472
        %v1478 = vmul.f32 %v499, %v1472
        %v1479 = vmul.f32 %v500, %v1472
        %v1480 = vmul.f32 %v501, %v1472
        %v1481 = vmul.f32 %v502, %v1472
        %v1482 = vmul.f32 %v503, %v1472
        %v1483 = vmul.f32 %v504, %v1472
        %v1484 = vmul.f32 %v505, %v1472
        %v1485 = vmul.f32 %v516, %v1472
        %v1486 = vmul.f32 %v517, %v1472
        %v1487 = vmul.f32 %v528, %v1472
        %v1488 = vmul.f32 %v529, %v1472
        %v1489 = vadd.f32 %v1456, %v1473
        %v1490 = vadd.f32 %v1457, %v1474
        %v1491 = vadd.f32 %v1458, %v1475
        %v1492 = vadd.f32 %v1459, %v1476
        %v1493 = vadd.f32 %v1460, %v1477
        %v1494 = vadd.f32 %v1461, %v1478
        %v1495 = vadd.f32 %v1462, %v1479
        %v1496 = vadd.f32 %v1463, %v1480
        %v1497 = vadd.f32 %v1464, %v1481
        %v1498 = vadd.f32 %v1465, %v1482
        %v1499 = vadd.f32 %v1466, %v1483
        %v1500 = vadd.f32 %v1467, %v1484
        %v1501 = vadd.f32 %v1468, %v1485
        %v1502 = vadd.f32 %v1469, %v1486
        %v1503 = vadd.f32 %v1470, %v1487
        %v1504 = vadd.f32 %v1471, %v1488
        %v1505 = vld [vmem:[%s4] sm:$0xff]
        %v1506 = vld [vmem:[%s4 + $0x8] sm:$0xff]
        %v1507 = vld [vmem:[%s4 + $0x10] sm:$0xff]
        %v1508 = vld [vmem:[%s4 + $0x18] sm:$0xff]
        %v1509 = vld [vmem:[%s4 + $0x20] sm:$0xff]
        %v1510 = vld [vmem:[%s4 + $0x28] sm:$0xff]
        %v1511 = vld [vmem:[%s4 + $0x30] sm:$0xff]
        %v1512 = vld [vmem:[%s4 + $0x38] sm:$0xff]
        %v1513 = vld [vmem:[%s4 + $0x40] sm:$0xff]
        %v1514 = vld [vmem:[%s4 + $0x48] sm:$0xff]
        %v1515 = vld [vmem:[%s4 + $0x50] sm:$0xff]
        %v1516 = vld [vmem:[%s4 + $0x58] sm:$0xff]
        %v1517 = vld [vmem:[%s4 + $0x60] sm:$0xff]
        %v1518 = vld [vmem:[%s4 + $0x68] sm:$0xff]
        %v1519 = vld [vmem:[%s4 + $0x70] sm:$0xff]
        %v1520 = vld [vmem:[%s4 + $0x78] sm:$0xff]
        %v1521 = vld [vmem:[%s5] sm:$0x1]
        %v1523 = vperm.slane %v1521, 0
        %1525 = vmatpush.msra.mxu0 %v1520
        %1526 = vmatpush.msra.mxu0 %v1519
        %1527 = vmatpush.msra.mxu0 %v1518
        %1528 = vmatpush.msra.mxu0 %v1517
        %1529 = vmatpush.msra.mxu0 %v1516
        %1530 = vmatpush.msra.mxu0 %v1515
        %1531 = vmatpush.msra.mxu0 %v1514
        %1532 = vmatpush.msra.mxu0 %v1513
        %1533 = vmatpush.msra.mxu0 %v1512
        %1534 = vmatpush.msra.mxu0 %v1511
        %1535 = vmatpush.msra.mxu0 %v1510
        %1536 = vmatpush.msra.mxu0 %v1509
        %1537 = vmatpush.msra.mxu0 %v1508
        %1538 = vmatpush.msra.mxu0 %v1507
        %1539 = vmatpush.msra.mxu0 %v1506
        %1540 = vmatpush.msra.mxu0 %v1505
        %1541 = vmatmul.f32.gmra.mxu0 %v1489
        %v1542 = vpop.f32.mrf.mxu0
        %v1543 = vadd.f32 %v1523, %v1542
        %1544 = vmatmul.f32.gmra.mxu0 %v1490
        %v1545 = vpop.f32.mrf.mxu0
        %v1546 = vadd.f32 %v1523, %v1545
        %1547 = vmatmul.f32.gmra.mxu0 %v1491
        %v1548 = vpop.f32.mrf.mxu0
        %v1549 = vadd.f32 %v1523, %v1548
        %1550 = vmatmul.f32.gmra.mxu0 %v1492
        %v1551 = vpop.f32.mrf.mxu0
        %v1552 = vadd.f32 %v1523, %v1551
        %1553 = vmatmul.f32.gmra.mxu0 %v1493
        %v1554 = vpop.f32.mrf.mxu0
        %v1555 = vadd.f32 %v1523, %v1554
        %1556 = vmatmul.f32.gmra.mxu0 %v1494
        %v1557 = vpop.f32.mrf.mxu0
        %v1558 = vadd.f32 %v1523, %v1557
        %1559 = vmatmul.f32.gmra.mxu0 %v1495
        %v1560 = vpop.f32.mrf.mxu0
        %v1561 = vadd.f32 %v1523, %v1560
        %1562 = vmatmul.f32.gmra.mxu0 %v1496
        %v1563 = vpop.f32.mrf.mxu0
        %v1564 = vadd.f32 %v1523, %v1563
        %1565 = vmatmul.f32.gmra.mxu0 %v1497
        %v1566 = vpop.f32.mrf.mxu0
        %v1567 = vadd.f32 %v1523, %v1566
        %1568 = vmatmul.f32.gmra.mxu0 %v1498
        %v1569 = vpop.f32.mrf.mxu0
        %v1570 = vadd.f32 %v1523, %v1569
        %1571 = vmatmul.f32.gmra.mxu0 %v1499
        %v1572 = vpop.f32.mrf.mxu0
        %v1573 = vadd.f32 %v1523, %v1572
        %1574 = vmatmul.f32.gmra.mxu0 %v1500
        %v1575 = vpop.f32.mrf.mxu0
        %v1576 = vadd.f32 %v1523, %v1575
        %1577 = vmatmul.f32.gmra.mxu0 %v1501
        %v1578 = vpop.f32.mrf.mxu0
        %v1579 = vadd.f32 %v1523, %v1578
        %1580 = vmatmul.f32.gmra.mxu0 %v1502
        %v1581 = vpop.f32.mrf.mxu0
        %v1582 = vadd.f32 %v1523, %v1581
        %1583 = vmatmul.f32.gmra.mxu0 %v1503
        %v1584 = vpop.f32.mrf.mxu0
        %v1585 = vadd.f32 %v1523, %v1584
        %1586 = vmatmul.f32.gmra.mxu0 %v1504
        %v1587 = vpop.f32.mrf.mxu0
        %v1588 = vadd.f32 %v1523, %v1587
        %1589 = vdwg.mxu0
        %1590 = vst.msk [vmem:[%s346] sm:$0xff] %vm1203, %v1543
        %1591 = vst.msk [vmem:[%s346 + $0x8] sm:$0xff] %vm1203, %v1546
        %1592 = vst.msk [vmem:[%s346 + $0x10] sm:$0xff] %vm1203, %v1549
        %1593 = vst.msk [vmem:[%s346 + $0x18] sm:$0xff] %vm1203, %v1552
        %1594 = vst.msk [vmem:[%s346 + $0x20] sm:$0xff] %vm1203, %v1555
        %1595 = vst.msk [vmem:[%s346 + $0x28] sm:$0xff] %vm1203, %v1558
        %1596 = vst.msk [vmem:[%s346 + $0x30] sm:$0xff] %vm1203, %v1561
        %1597 = vst.msk [vmem:[%s346 + $0x38] sm:$0xff] %vm1203, %v1564
        %1598 = vst.msk [vmem:[%s346 + $0x40] sm:$0xff] %vm1203, %v1567
        %1599 = vst.msk [vmem:[%s346 + $0x48] sm:$0xff] %vm1203, %v1570
        %1600 = vst.msk [vmem:[%s346 + $0x50] sm:$0xff] %vm1203, %v1573
        %1601 = vst.msk [vmem:[%s346 + $0x58] sm:$0xff] %vm1203, %v1576
        %1602 = vst.msk [vmem:[%s346 + $0x60] sm:$0xff] %vm1203, %v1579
        %1603 = vst.msk [vmem:[%s346 + $0x68] sm:$0xff] %vm1203, %v1582
        %1604 = vst.msk [vmem:[%s346 + $0x70] sm:$0xff] %vm1203, %v1585
        %1605 = vst.msk [vmem:[%s346 + $0x78] sm:$0xff] %vm1203, %v1588
        %s1606 = smul.u32 16, %s27
        %p1607 = scmp.lt.s32.totalorder %s26, 1
        %s1608 = scalar_select %p1607, %s26, 1
        %p1609 = scmp.lt.s32.totalorder %s1606, 31
        %s1610 = scalar_select %p1609, %s1606, 31
        %s1611 = smul.addr %s1608, 32
        %s1612 = sadd.s32 %s1610, %s1611
        %s1613 = smul.addr %s1612, 8
        %s1614 = scalar_lea.vmem %s6, %s1613
        %s1615 = smul.u32 16, %s27
        %p1616 = scmp.lt.s32.totalorder %s26, 1
        %s1617 = scalar_select %p1616, %s26, 1
        %p1618 = scmp.lt.s32.totalorder %s1615, 31
        %s1619 = scalar_select %p1618, %s1615, 31
        %s1620 = smul.addr %s1617, 32
        %s1621 = sadd.s32 %s1619, %s1620
        %s1622 = smul.addr %s1621, 8
        %s1623 = scalar_lea.vmem %s7, %s1622
        // Predicated region
        $region49: #{centernet_head_forward.1} parent=43 // pred_check
          %p1624 = pneg %p185
        $region50: #{centernet_head_forward.1} parent=43 // pred_check_branch
          %1626 = sbr.rel (%p1624) target = $region52
        $region51: #{centernet_head_forward.1} parent=43 // pred_region
          %s1627 = smul.u32 16, %s27
        $region52: #{centernet_head_forward.1} parent=43 // pred_fallthru
          _
        // Predicated region
        $region53: #{centernet_head_forward.1} parent=43 // pred_check
          %p1628 = pneg %p213
        $region54: #{centernet_head_forward.1} parent=43 // pred_check_branch
          %1630 = sbr.rel (%p1628) target = $region56
        $region55: #{centernet_head_forward.1} parent=43 // pred_region
          %s1631 = smul.u32 16, %s27
        $region56: #{centernet_head_forward.1} parent=43 // pred_fallthru
          _
      $region44: #{centernet_head_forward.1} parent=5 // pred_fallthru
        _
      %p1632 = scmp.le.s32.totalorder 2, %s17
      // Predicated region
      $region57: #{centernet_head_forward.1} parent=5 // pred_check
        %p1633 = pneg %p1632
      $region58: #{centernet_head_forward.1} parent=5 // pred_check_branch
        %1635 = sbr.rel (%p1633) target = $region60
      $region59: #{centernet_head_forward.1} parent=5 // pred_region
        %s1636 = ssub.s32 %s17, 2
        // Predicated region
        $region61: #{centernet_head_forward.1} parent=59 // pred_check
          %p1637 = pneg %p191
        $region62: #{centernet_head_forward.1} parent=59 // pred_check_branch
          %1639 = sbr.rel (%p1637) target = $region64
        $region63: #{centernet_head_forward.1} parent=59 // pred_region
          %s1640 = smul.u32 16, %s29
          %p1641 = scmp.lt.s32.totalorder %s28, 1
          %s1642 = scalar_select %p1641, %s28, 1
          %p1643 = scmp.lt.s32.totalorder %s1640, 31
          %s1644 = scalar_select %p1643, %s1640, 31
          %s1645 = smul.addr %s1642, 32
          %s1646 = sadd.s32 %s1644, %s1645
          %s1647 = smul.addr %s1646, 8
          %s1648 = scalar_lea.vmem %s6, %s1647
        $region64: #{centernet_head_forward.1} parent=59 // pred_fallthru
          _
        // Predicated region
        $region65: #{centernet_head_forward.1} parent=59 // pred_check
          %p1649 = pneg %p219
        $region66: #{centernet_head_forward.1} parent=59 // pred_check_branch
          %1651 = sbr.rel (%p1649) target = $region68
        $region67: #{centernet_head_forward.1} parent=59 // pred_region
          %s1652 = smul.u32 16, %s29
          %p1653 = scmp.lt.s32.totalorder %s28, 1
          %s1654 = scalar_select %p1653, %s28, 1
          %p1655 = scmp.lt.s32.totalorder %s1652, 31
          %s1656 = scalar_select %p1655, %s1652, 31
          %s1657 = smul.addr %s1654, 32
          %s1658 = sadd.s32 %s1656, %s1657
          %s1659 = smul.addr %s1658, 8
          %s1660 = scalar_lea.vmem %s7, %s1659
        $region68: #{centernet_head_forward.1} parent=59 // pred_fallthru
          _
      $region60: #{centernet_head_forward.1} parent=5 // pred_fallthru
        _
    $region6: #{centernet_head_forward.1} parent=1 // loop_footer
      %s21 = sadd.s32 1, %s17
    $region7: #{centernet_head_forward.1} parent=1 // loop_footer_branch
      %16 = sbr.rel target = $region3
    $region8: #{centernet_head_forward.1} parent=1 // loop_exit
      _
    %1661 = vsyncpa [#allocation3], 1
    %s1662 = scalar_lea.sflag [#allocation3], 1
    %1663 = vsyncpa %s1662, 1

</llo_original>
